<compile_context>
chip_gen: v6e
topology: v6e:2x2x1
jax: 0.10.0
libtpu: 0.0.40
codegen_flags: <defaults>
</compile_context>

<pallas_src>
import jax
import jax.numpy as jnp
from jax import lax
from jax.experimental import pallas as pl
from jax.experimental.pallas import tpu as pltpu

K_IN, K_OUT, K_STATE = 10, 18, 32      # k_out >= 18 (6 M_A + 6 tau + 6 D_V)
K_OUT_PAD = 24                         # ma -> rows 0:6, tau -> 8:14, dv -> 16:22

# TODO(synk): hyper_para.yaml is not available; rigid_body_mass hardcoded deterministically.
RB_MASS_DIAG = jnp.array([30.0, 30.0, 30.0, 5.0, 5.0, 5.0], dtype=jnp.float32)


def _round_up(x, m):
    return (x + m - 1) // m * m


# --------------------------------------------------------------- fused kernel
def fused_kernel(x_ref, w_ih_ref, w_hh_ref, b_h_ref, w_ho_ref, b_o_ref, rb_ref,
                 h0_ref, acc_ref, hfin_ref):
    # x_ref:   (T, K_IN, tm)    time-major, batch rows on lanes
    # acc_ref: (T, 6, tm)       fused dynamics output (lane-dense stores)
    # hfin_ref:(K_STATE, tm)    final hidden state
    T = x_ref.shape[0]
    tm = x_ref.shape[2]

    w_ih = w_ih_ref[...]                                    # (K_STATE, K_IN)
    w_hh = w_hh_ref[...]                                    # (K_STATE, K_STATE)
    w_ho = w_ho_ref[...]                                    # (K_OUT_PAD, K_STATE)
    # Hoist lane-broadcasts out of the loop (JAX does not CSE broadcast_in_dim).
    b_h = jnp.broadcast_to(b_h_ref[...], (K_STATE, tm))
    b_o = jnp.broadcast_to(b_o_ref[...], (K_OUT_PAD, tm))
    rbm = jnp.broadcast_to(rb_ref[...], (6, tm))

    def step(t, h):
        x_t = x_ref[t]                                       # (K_IN, tm)
        # Only the h-dependent matmul + tanh is on the serial chain; the input
        # projection / output head overlap across unrolled iterations.
        pre = (jnp.dot(w_ih, x_t, preferred_element_type=jnp.float32)
               + jnp.dot(w_hh, h, preferred_element_type=jnp.float32)
               + b_h)
        h_new = jnp.tanh(pre)                                # (K_STATE, tm)

        out = jnp.dot(w_ho, h_new, preferred_element_type=jnp.float32) + b_o
        ma = out[0:6, :]                                     # sublane-tile aligned
        tau = out[8:14, :]
        dv = out[16:22, :]
        vel = x_t[0:6, :]                                    # body_vel = first 6 feats
        # Total mass matrix is diagonal (diag(M_A') + diag(rb_mass)) -> its
        # inverse is an element-wise reciprocal.
        # TODO(synk): Robot.dynamics_forward internals (Coriolis / restoring
        #             g(euler)) are not given; acc = M^{-1}(tau - D(v) v) is used.
        acc_ref[t] = (tau - dv * vel) * pl.reciprocal(ma + rbm, approx=True)
        return h_new

    h_fin = lax.fori_loop(0, T, step, h0_ref[...],
                          unroll=True if T <= 32 else 8)
    hfin_ref[...] = h_fin


def run_fused(x_t, w_ih, w_hh, b_h, w_ho_p, b_o_p, rb, h0, *, tm):
    T, _, M_pad = x_t.shape
    grid = (M_pad // tm,)
    in_specs = [
        pl.BlockSpec((T, K_IN, tm), lambda i: (0, 0, i)),
        pl.BlockSpec((K_STATE, K_IN), lambda i: (0, 0)),
        pl.BlockSpec((K_STATE, K_STATE), lambda i: (0, 0)),
        pl.BlockSpec((K_STATE, 1), lambda i: (0, 0)),
        pl.BlockSpec((K_OUT_PAD, K_STATE), lambda i: (0, 0)),
        pl.BlockSpec((K_OUT_PAD, 1), lambda i: (0, 0)),
        pl.BlockSpec((6, 1), lambda i: (0, 0)),
        pl.BlockSpec((K_STATE, tm), lambda i: (0, i)),
    ]
    out_specs = (
        pl.BlockSpec((T, 6, tm), lambda i: (0, 0, i)),
        pl.BlockSpec((K_STATE, tm), lambda i: (0, i)),
    )
    return pl.pallas_call(
        fused_kernel,
        out_shape=(jax.ShapeDtypeStruct((T, 6, M_pad), jnp.float32),
                   jax.ShapeDtypeStruct((K_STATE, M_pad), jnp.float32)),
        grid_spec=pltpu.PrefetchScalarGridSpec(
            num_scalar_prefetch=0,
            grid=grid,
            in_specs=in_specs,
            out_specs=out_specs),
        compiler_params=pltpu.CompilerParams(
            dimension_semantics=("parallel",),
            vmem_limit_bytes=32 * 1024 * 1024),
    )(x_t, w_ih, w_hh, b_h, w_ho_p, b_o_p, rb, h0)


# -------------------------------------------------------------------- JAX glue
def quaternion_to_euler(q):
    # q in (w, x, y, z) order (forward reorders from (x, y, z, w)).
    w, x, y, z = q[..., 0], q[..., 1], q[..., 2], q[..., 3]
    roll = jnp.arctan2(2.0 * (w * x + y * z), 1.0 - 2.0 * (x * x + y * y))
    pitch = jnp.arcsin(jnp.clip(2.0 * (w * y - z * x), -1.0, 1.0))
    yaw = jnp.arctan2(2.0 * (w * z + x * y), 1.0 - 2.0 * (y * y + z * z))
    return jnp.stack([roll, pitch, yaw], axis=-1)


def init_params(seed=42):
    # Weights stored directly in the kernel's transposed layout
    # (W_ih: (k_state, k_in) etc., matching nn.RNNCell's native shapes).
    k = jax.random.PRNGKey(seed)
    ks = jax.random.split(k, 6)
    s = 1.0 / jnp.sqrt(K_STATE)
    w_ih = jax.random.uniform(ks[0], (K_STATE, K_IN), jnp.float32, -s, s)
    w_hh = jax.random.uniform(ks[1], (K_STATE, K_STATE), jnp.float32, -s, s)
    b_h = jax.random.uniform(ks[2], (K_STATE, 1), jnp.float32, -s, s)
    w_ho = jax.random.uniform(ks[3], (K_OUT, K_STATE), jnp.float32, -s, s)
    b_o = jax.random.uniform(ks[4], (K_OUT, 1), jnp.float32, -s, s)
    return w_ih, w_hh, b_h, w_ho, b_o


def forward(all_input, params, state0=None):
    B, N, T, _ = all_input.shape
    M = B * N
    w_ih, w_hh, b_h, w_ho, b_o = params
    inp = all_input[..., 4:].astype(jnp.float32)             # (B, N, T, K_IN)

    # Pad the 18-row output head to 24 rows so ma/tau/dv slices inside the
    # kernel start at sublane-tile-aligned offsets 0 / 8 / 16.
    w_ho_p = jnp.zeros((K_OUT_PAD, K_STATE), jnp.float32)
    w_ho_p = (w_ho_p.at[0:6].set(w_ho[0:6])
                     .at[8:14].set(w_ho[6:12])
                     .at[16:22].set(w_ho[12:18]))
    b_o_p = jnp.zeros((K_OUT_PAD, 1), jnp.float32)
    b_o_p = (b_o_p.at[0:6].set(b_o[0:6])
                   .at[8:14].set(b_o[6:12])
                   .at[16:22].set(b_o[12:18]))

    # TODO(synk): euler = quaternion_to_euler(all_input[..., [3,0,1,2]]) would feed
    # Robot's (unknown) restoring-force term; unused in the simplified dynamics so
    # the transcendental work is skipped entirely.

    # Tile selection: lane-width multiples of 128, shrink only if T is so large
    # that the double-buffered (T, feat, tm) blocks would blow scoped VMEM.
    tm = 256
    while tm > 128 and 192 * T * tm > (24 << 20):
        tm //= 2
    M_pad = _round_up(max(M, 1), tm)

    # (B, N, T, K_IN) -> (T, K_IN, M_pad): features on sublanes, rows on lanes.
    x_t = jnp.transpose(inp.reshape(M, T, K_IN), (1, 2, 0))
    x_t = jnp.pad(x_t, ((0, 0), (0, 0), (0, M_pad - M)))

    if state0 is None:
        h0 = jnp.zeros((K_STATE, M_pad), jnp.float32)
    else:
        h0 = jnp.transpose(state0.reshape(M, K_STATE).astype(jnp.float32), (1, 0))
        h0 = jnp.pad(h0, ((0, 0), (0, M_pad - M)))

    acc_t, h_fin = run_fused(x_t, w_ih, w_hh, b_h, w_ho_p, b_o_p,
                             RB_MASS_DIAG.reshape(6, 1), h0, tm=tm)

    acc_pred = jnp.transpose(acc_t[:, :, :M], (2, 0, 1)).reshape(B, N, T, 6)
    state = jnp.transpose(h_fin[:, :M], (1, 0)).reshape(B, N, 1, K_STATE)
    return acc_pred, state


if __name__ == "__main__":
    B, N, T = 2, 2, 8
    key = jax.random.PRNGKey(0)
    all_input = jax.random.normal(key, (B, N, T, 4 + K_IN), dtype=jnp.float32)
    params = init_params()

    acc_pred, state = forward(all_input, params)
    jax.block_until_ready((acc_pred, state))

    assert acc_pred.shape == (B, N, T, 6)
    assert state.shape == (B, N, 1, K_STATE)
    assert bool(jnp.all(jnp.isfinite(acc_pred)))
    assert bool(jnp.all(jnp.isfinite(state)))
    print("KERNEL_OK")
</pallas_src>

<mosaic_0001>
module attributes {stable_mosaic.version = 11 : i64} {
  func.func @fused_kernel(%arg0: i32, %arg1: memref<8x10x256xf32, #tpu.memory_space<vmem>>, %arg2: memref<32x10xf32, #tpu.memory_space<vmem>>, %arg3: memref<32x32xf32, #tpu.memory_space<vmem>>, %arg4: memref<32x1xf32, #tpu.memory_space<vmem>>, %arg5: memref<24x32xf32, #tpu.memory_space<vmem>>, %arg6: memref<24x1xf32, #tpu.memory_space<vmem>>, %arg7: memref<6x1xf32, #tpu.memory_space<vmem>>, %arg8: memref<32x256xf32, #tpu.memory_space<vmem>>, %arg9: memref<8x6x256xf32, #tpu.memory_space<vmem>>, %arg10: memref<32x256xf32, #tpu.memory_space<vmem>>) attributes {dimension_semantics = [#tpu.dimension_semantics<parallel>], iteration_bounds = array<i64: 1>, scalar_prefetch = 0 : i64, scratch_operands = 0 : i64, tpu.core_type = #tpu.core_type<tc>, window_params = [{transform_indices = @transform_0, window_bounds = array<i64: 8, 10, 256>}, {pipeline_mode = #tpu.pipeline_mode<synchronous>, transform_indices = @transform_1, window_bounds = array<i64: 32, 10>}, {pipeline_mode = #tpu.pipeline_mode<synchronous>, transform_indices = @transform_2, window_bounds = array<i64: 32, 32>}, {pipeline_mode = #tpu.pipeline_mode<synchronous>, transform_indices = @transform_3, window_bounds = array<i64: 32, 1>}, {pipeline_mode = #tpu.pipeline_mode<synchronous>, transform_indices = @transform_4, window_bounds = array<i64: 24, 32>}, {pipeline_mode = #tpu.pipeline_mode<synchronous>, transform_indices = @transform_5, window_bounds = array<i64: 24, 1>}, {pipeline_mode = #tpu.pipeline_mode<synchronous>, transform_indices = @transform_6, window_bounds = array<i64: 6, 1>}, {transform_indices = @transform_7, window_bounds = array<i64: 32, 256>}, {transform_indices = @transform_8, window_bounds = array<i64: 8, 6, 256>}, {transform_indices = @transform_9, window_bounds = array<i64: 32, 256>}]} {
    %c0 = arith.constant 0 : index
    %c0_0 = arith.constant 0 : index
    %0 = vector.load %arg2[%c0, %c0_0] : memref<32x10xf32, #tpu.memory_space<vmem>>, vector<32x10xf32>
    %c0_1 = arith.constant 0 : index
    %c0_2 = arith.constant 0 : index
    %1 = vector.load %arg3[%c0_1, %c0_2] : memref<32x32xf32, #tpu.memory_space<vmem>>, vector<32x32xf32>
    %c0_3 = arith.constant 0 : index
    %c0_4 = arith.constant 0 : index
    %2 = vector.load %arg5[%c0_3, %c0_4] : memref<24x32xf32, #tpu.memory_space<vmem>>, vector<24x32xf32>
    %c0_5 = arith.constant 0 : index
    %c0_6 = arith.constant 0 : index
    %3 = vector.load %arg4[%c0_5, %c0_6] : memref<32x1xf32, #tpu.memory_space<vmem>>, vector<32x1xf32>
    %4 = vector.shape_cast %3 : vector<32x1xf32> to vector<32x1xf32>
    %5 = vector.broadcast %4 : vector<32x1xf32> to vector<32x256xf32>
    %c0_7 = arith.constant 0 : index
    %c0_8 = arith.constant 0 : index
    %6 = vector.load %arg6[%c0_7, %c0_8] : memref<24x1xf32, #tpu.memory_space<vmem>>, vector<24x1xf32>
    %7 = vector.shape_cast %6 : vector<24x1xf32> to vector<24x1xf32>
    %8 = vector.broadcast %7 : vector<24x1xf32> to vector<24x256xf32>
    %c0_9 = arith.constant 0 : index
    %c0_10 = arith.constant 0 : index
    %9 = vector.load %arg7[%c0_9, %c0_10] : memref<6x1xf32, #tpu.memory_space<vmem>>, vector<6x1xf32>
    %10 = vector.shape_cast %9 : vector<6x1xf32> to vector<6x1xf32>
    %11 = vector.broadcast %10 : vector<6x1xf32> to vector<6x256xf32>
    %c0_11 = arith.constant 0 : index
    %c0_12 = arith.constant 0 : index
    %12 = vector.load %arg8[%c0_11, %c0_12] : memref<32x256xf32, #tpu.memory_space<vmem>>, vector<32x256xf32>
    %c0_i32 = arith.constant 0 : i32
    %13 = arith.index_cast %c0_i32 : i32 to index
    %c0_13 = arith.constant 0 : index
    %c0_14 = arith.constant 0 : index
    %14 = vector.load %arg1[%13, %c0_13, %c0_14] : memref<8x10x256xf32, #tpu.memory_space<vmem>>, vector<1x10x256xf32>
    %15 = vector.shape_cast %14 : vector<1x10x256xf32> to vector<10x256xf32>
    %cst = arith.constant dense<0.000000e+00> : vector<32x256xf32>
    %16 = tpu.matmul %0, %15, %cst {dimension_numbers = #tpu.dot_dimension_numbers<[1], [0], [0], [1], [0, 0, 1, 1], [], []>} : vector<32x10xf32>, vector<10x256xf32>, vector<32x256xf32> -> vector<32x256xf32>
    %cst_15 = arith.constant dense<0.000000e+00> : vector<32x256xf32>
    %17 = tpu.matmul %1, %12, %cst_15 {dimension_numbers = #tpu.dot_dimension_numbers<[1], [0], [0], [1], [0, 0, 1, 1], [], []>} : vector<32x32xf32>, vector<32x256xf32>, vector<32x256xf32> -> vector<32x256xf32>
    %18 = arith.addf %16, %17 : vector<32x256xf32>
    %19 = arith.addf %18, %5 : vector<32x256xf32>
    %20 = math.tanh %19 : vector<32x256xf32>
    %cst_16 = arith.constant dense<0.000000e+00> : vector<24x256xf32>
    %21 = tpu.matmul %2, %20, %cst_16 {dimension_numbers = #tpu.dot_dimension_numbers<[1], [0], [0], [1], [0, 0, 1, 1], [], []>} : vector<24x32xf32>, vector<32x256xf32>, vector<24x256xf32> -> vector<24x256xf32>
    %22 = arith.addf %21, %8 : vector<24x256xf32>
    %23 = vector.extract_strided_slice %22 {offsets = [0, 0], sizes = [6, 256], strides = [1, 1]} : vector<24x256xf32> to vector<6x256xf32>
    %24 = vector.extract_strided_slice %22 {offsets = [8, 0], sizes = [6, 256], strides = [1, 1]} : vector<24x256xf32> to vector<6x256xf32>
    %25 = vector.extract_strided_slice %22 {offsets = [16, 0], sizes = [6, 256], strides = [1, 1]} : vector<24x256xf32> to vector<6x256xf32>
    %26 = vector.extract_strided_slice %15 {offsets = [0, 0], sizes = [6, 256], strides = [1, 1]} : vector<10x256xf32> to vector<6x256xf32>
    %27 = arith.mulf %25, %26 : vector<6x256xf32>
    %28 = arith.subf %24, %27 : vector<6x256xf32>
    %29 = arith.addf %23, %11 : vector<6x256xf32>
    %30 = tpu.reciprocal %29 {approx = true} : vector<6x256xf32> -> vector<6x256xf32>
    %31 = arith.mulf %28, %30 : vector<6x256xf32>
    %32 = arith.index_cast %c0_i32 : i32 to index
    %c0_17 = arith.constant 0 : index
    %c0_18 = arith.constant 0 : index
    %33 = vector.load %arg9[%32, %c0_17, %c0_18] : memref<8x6x256xf32, #tpu.memory_space<vmem>>, vector<1x6x256xf32>
    %34 = vector.shape_cast %33 : vector<1x6x256xf32> to vector<6x256xf32>
    %35 = vector.shape_cast %31 : vector<6x256xf32> to vector<1x6x256xf32>
    tpu.vector_store %arg9[%32, %c0_17, %c0_18], %35 {strides = array<i32>} : memref<8x6x256xf32, #tpu.memory_space<vmem>>, vector<1x6x256xf32>,
    %c1_i32 = arith.constant 1 : i32
    %36 = arith.index_cast %c1_i32 : i32 to index
    %c0_19 = arith.constant 0 : index
    %c0_20 = arith.constant 0 : index
    %37 = vector.load %arg1[%36, %c0_19, %c0_20] : memref<8x10x256xf32, #tpu.memory_space<vmem>>, vector<1x10x256xf32>
    %38 = vector.shape_cast %37 : vector<1x10x256xf32> to vector<10x256xf32>
    %cst_21 = arith.constant dense<0.000000e+00> : vector<32x256xf32>
    %39 = tpu.matmul %0, %38, %cst_21 {dimension_numbers = #tpu.dot_dimension_numbers<[1], [0], [0], [1], [0, 0, 1, 1], [], []>} : vector<32x10xf32>, vector<10x256xf32>, vector<32x256xf32> -> vector<32x256xf32>
    %cst_22 = arith.constant dense<0.000000e+00> : vector<32x256xf32>
    %40 = tpu.matmul %1, %20, %cst_22 {dimension_numbers = #tpu.dot_dimension_numbers<[1], [0], [0], [1], [0, 0, 1, 1], [], []>} : vector<32x32xf32>, vector<32x256xf32>, vector<32x256xf32> -> vector<32x256xf32>
    %41 = arith.addf %39, %40 : vector<32x256xf32>
    %42 = arith.addf %41, %5 : vector<32x256xf32>
    %43 = math.tanh %42 : vector<32x256xf32>
    %cst_23 = arith.constant dense<0.000000e+00> : vector<24x256xf32>
    %44 = tpu.matmul %2, %43, %cst_23 {dimension_numbers = #tpu.dot_dimension_numbers<[1], [0], [0], [1], [0, 0, 1, 1], [], []>} : vector<24x32xf32>, vector<32x256xf32>, vector<24x256xf32> -> vector<24x256xf32>
    %45 = arith.addf %44, %8 : vector<24x256xf32>
    %46 = vector.extract_strided_slice %45 {offsets = [0, 0], sizes = [6, 256], strides = [1, 1]} : vector<24x256xf32> to vector<6x256xf32>
    %47 = vector.extract_strided_slice %45 {offsets = [8, 0], sizes = [6, 256], strides = [1, 1]} : vector<24x256xf32> to vector<6x256xf32>
    %48 = vector.extract_strided_slice %45 {offsets = [16, 0], sizes = [6, 256], strides = [1, 1]} : vector<24x256xf32> to vector<6x256xf32>
    %49 = vector.extract_strided_slice %38 {offsets = [0, 0], sizes = [6, 256], strides = [1, 1]} : vector<10x256xf32> to vector<6x256xf32>
    %50 = arith.mulf %48, %49 : vector<6x256xf32>
    %51 = arith.subf %47, %50 : vector<6x256xf32>
    %52 = arith.addf %46, %11 : vector<6x256xf32>
    %53 = tpu.reciprocal %52 {approx = true} : vector<6x256xf32> -> vector<6x256xf32>
    %54 = arith.mulf %51, %53 : vector<6x256xf32>
    %55 = arith.index_cast %c1_i32 : i32 to index
    %c0_24 = arith.constant 0 : index
    %c0_25 = arith.constant 0 : index
    %56 = vector.load %arg9[%55, %c0_24, %c0_25] : memref<8x6x256xf32, #tpu.memory_space<vmem>>, vector<1x6x256xf32>
    %57 = vector.shape_cast %56 : vector<1x6x256xf32> to vector<6x256xf32>
    %58 = vector.shape_cast %54 : vector<6x256xf32> to vector<1x6x256xf32>
    tpu.vector_store %arg9[%55, %c0_24, %c0_25], %58 {strides = array<i32>} : memref<8x6x256xf32, #tpu.memory_space<vmem>>, vector<1x6x256xf32>,
    %c2_i32 = arith.constant 2 : i32
    %59 = arith.index_cast %c2_i32 : i32 to index
    %c0_26 = arith.constant 0 : index
    %c0_27 = arith.constant 0 : index
    %60 = vector.load %arg1[%59, %c0_26, %c0_27] : memref<8x10x256xf32, #tpu.memory_space<vmem>>, vector<1x10x256xf32>
    %61 = vector.shape_cast %60 : vector<1x10x256xf32> to vector<10x256xf32>
    %cst_28 = arith.constant dense<0.000000e+00> : vector<32x256xf32>
    %62 = tpu.matmul %0, %61, %cst_28 {dimension_numbers = #tpu.dot_dimension_numbers<[1], [0], [0], [1], [0, 0, 1, 1], [], []>} : vector<32x10xf32>, vector<10x256xf32>, vector<32x256xf32> -> vector<32x256xf32>
    %cst_29 = arith.constant dense<0.000000e+00> : vector<32x256xf32>
    %63 = tpu.matmul %1, %43, %cst_29 {dimension_numbers = #tpu.dot_dimension_numbers<[1], [0], [0], [1], [0, 0, 1, 1], [], []>} : vector<32x32xf32>, vector<32x256xf32>, vector<32x256xf32> -> vector<32x256xf32>
    %64 = arith.addf %62, %63 : vector<32x256xf32>
    %65 = arith.addf %64, %5 : vector<32x256xf32>
    %66 = math.tanh %65 : vector<32x256xf32>
    %cst_30 = arith.constant dense<0.000000e+00> : vector<24x256xf32>
    %67 = tpu.matmul %2, %66, %cst_30 {dimension_numbers = #tpu.dot_dimension_numbers<[1], [0], [0], [1], [0, 0, 1, 1], [], []>} : vector<24x32xf32>, vector<32x256xf32>, vector<24x256xf32> -> vector<24x256xf32>
    %68 = arith.addf %67, %8 : vector<24x256xf32>
    %69 = vector.extract_strided_slice %68 {offsets = [0, 0], sizes = [6, 256], strides = [1, 1]} : vector<24x256xf32> to vector<6x256xf32>
    %70 = vector.extract_strided_slice %68 {offsets = [8, 0], sizes = [6, 256], strides = [1, 1]} : vector<24x256xf32> to vector<6x256xf32>
    %71 = vector.extract_strided_slice %68 {offsets = [16, 0], sizes = [6, 256], strides = [1, 1]} : vector<24x256xf32> to vector<6x256xf32>
    %72 = vector.extract_strided_slice %61 {offsets = [0, 0], sizes = [6, 256], strides = [1, 1]} : vector<10x256xf32> to vector<6x256xf32>
    %73 = arith.mulf %71, %72 : vector<6x256xf32>
    %74 = arith.subf %70, %73 : vector<6x256xf32>
    %75 = arith.addf %69, %11 : vector<6x256xf32>
    %76 = tpu.reciprocal %75 {approx = true} : vector<6x256xf32> -> vector<6x256xf32>
    %77 = arith.mulf %74, %76 : vector<6x256xf32>
    %78 = arith.index_cast %c2_i32 : i32 to index
    %c0_31 = arith.constant 0 : index
    %c0_32 = arith.constant 0 : index
    %79 = vector.load %arg9[%78, %c0_31, %c0_32] : memref<8x6x256xf32, #tpu.memory_space<vmem>>, vector<1x6x256xf32>
    %80 = vector.shape_cast %79 : vector<1x6x256xf32> to vector<6x256xf32>
    %81 = vector.shape_cast %77 : vector<6x256xf32> to vector<1x6x256xf32>
    tpu.vector_store %arg9[%78, %c0_31, %c0_32], %81 {strides = array<i32>} : memref<8x6x256xf32, #tpu.memory_space<vmem>>, vector<1x6x256xf32>,
    %c3_i32 = arith.constant 3 : i32
    %82 = arith.index_cast %c3_i32 : i32 to index
    %c0_33 = arith.constant 0 : index
    %c0_34 = arith.constant 0 : index
    %83 = vector.load %arg1[%82, %c0_33, %c0_34] : memref<8x10x256xf32, #tpu.memory_space<vmem>>, vector<1x10x256xf32>
    %84 = vector.shape_cast %83 : vector<1x10x256xf32> to vector<10x256xf32>
    %cst_35 = arith.constant dense<0.000000e+00> : vector<32x256xf32>
    %85 = tpu.matmul %0, %84, %cst_35 {dimension_numbers = #tpu.dot_dimension_numbers<[1], [0], [0], [1], [0, 0, 1, 1], [], []>} : vector<32x10xf32>, vector<10x256xf32>, vector<32x256xf32> -> vector<32x256xf32>
    %cst_36 = arith.constant dense<0.000000e+00> : vector<32x256xf32>
    %86 = tpu.matmul %1, %66, %cst_36 {dimension_numbers = #tpu.dot_dimension_numbers<[1], [0], [0], [1], [0, 0, 1, 1], [], []>} : vector<32x32xf32>, vector<32x256xf32>, vector<32x256xf32> -> vector<32x256xf32>
    %87 = arith.addf %85, %86 : vector<32x256xf32>
    %88 = arith.addf %87, %5 : vector<32x256xf32>
    %89 = math.tanh %88 : vector<32x256xf32>
    %cst_37 = arith.constant dense<0.000000e+00> : vector<24x256xf32>
    %90 = tpu.matmul %2, %89, %cst_37 {dimension_numbers = #tpu.dot_dimension_numbers<[1], [0], [0], [1], [0, 0, 1, 1], [], []>} : vector<24x32xf32>, vector<32x256xf32>, vector<24x256xf32> -> vector<24x256xf32>
    %91 = arith.addf %90, %8 : vector<24x256xf32>
    %92 = vector.extract_strided_slice %91 {offsets = [0, 0], sizes = [6, 256], strides = [1, 1]} : vector<24x256xf32> to vector<6x256xf32>
    %93 = vector.extract_strided_slice %91 {offsets = [8, 0], sizes = [6, 256], strides = [1, 1]} : vector<24x256xf32> to vector<6x256xf32>
    %94 = vector.extract_strided_slice %91 {offsets = [16, 0], sizes = [6, 256], strides = [1, 1]} : vector<24x256xf32> to vector<6x256xf32>
    %95 = vector.extract_strided_slice %84 {offsets = [0, 0], sizes = [6, 256], strides = [1, 1]} : vector<10x256xf32> to vector<6x256xf32>
    %96 = arith.mulf %94, %95 : vector<6x256xf32>
    %97 = arith.subf %93, %96 : vector<6x256xf32>
    %98 = arith.addf %92, %11 : vector<6x256xf32>
    %99 = tpu.reciprocal %98 {approx = true} : vector<6x256xf32> -> vector<6x256xf32>
    %100 = arith.mulf %97, %99 : vector<6x256xf32>
    %101 = arith.index_cast %c3_i32 : i32 to index
    %c0_38 = arith.constant 0 : index
    %c0_39 = arith.constant 0 : index
    %102 = vector.load %arg9[%101, %c0_38, %c0_39] : memref<8x6x256xf32, #tpu.memory_space<vmem>>, vector<1x6x256xf32>
    %103 = vector.shape_cast %102 : vector<1x6x256xf32> to vector<6x256xf32>
    %104 = vector.shape_cast %100 : vector<6x256xf32> to vector<1x6x256xf32>
    tpu.vector_store %arg9[%101, %c0_38, %c0_39], %104 {strides = array<i32>} : memref<8x6x256xf32, #tpu.memory_space<vmem>>, vector<1x6x256xf32>,
    %c4_i32 = arith.constant 4 : i32
    %105 = arith.index_cast %c4_i32 : i32 to index
    %c0_40 = arith.constant 0 : index
    %c0_41 = arith.constant 0 : index
    %106 = vector.load %arg1[%105, %c0_40, %c0_41] : memref<8x10x256xf32, #tpu.memory_space<vmem>>, vector<1x10x256xf32>
    %107 = vector.shape_cast %106 : vector<1x10x256xf32> to vector<10x256xf32>
    %cst_42 = arith.constant dense<0.000000e+00> : vector<32x256xf32>
    %108 = tpu.matmul %0, %107, %cst_42 {dimension_numbers = #tpu.dot_dimension_numbers<[1], [0], [0], [1], [0, 0, 1, 1], [], []>} : vector<32x10xf32>, vector<10x256xf32>, vector<32x256xf32> -> vector<32x256xf32>
    %cst_43 = arith.constant dense<0.000000e+00> : vector<32x256xf32>
    %109 = tpu.matmul %1, %89, %cst_43 {dimension_numbers = #tpu.dot_dimension_numbers<[1], [0], [0], [1], [0, 0, 1, 1], [], []>} : vector<32x32xf32>, vector<32x256xf32>, vector<32x256xf32> -> vector<32x256xf32>
    %110 = arith.addf %108, %109 : vector<32x256xf32>
    %111 = arith.addf %110, %5 : vector<32x256xf32>
    %112 = math.tanh %111 : vector<32x256xf32>
    %cst_44 = arith.constant dense<0.000000e+00> : vector<24x256xf32>
    %113 = tpu.matmul %2, %112, %cst_44 {dimension_numbers = #tpu.dot_dimension_numbers<[1], [0], [0], [1], [0, 0, 1, 1], [], []>} : vector<24x32xf32>, vector<32x256xf32>, vector<24x256xf32> -> vector<24x256xf32>
    %114 = arith.addf %113, %8 : vector<24x256xf32>
    %115 = vector.extract_strided_slice %114 {offsets = [0, 0], sizes = [6, 256], strides = [1, 1]} : vector<24x256xf32> to vector<6x256xf32>
    %116 = vector.extract_strided_slice %114 {offsets = [8, 0], sizes = [6, 256], strides = [1, 1]} : vector<24x256xf32> to vector<6x256xf32>
    %117 = vector.extract_strided_slice %114 {offsets = [16, 0], sizes = [6, 256], strides = [1, 1]} : vector<24x256xf32> to vector<6x256xf32>
    %118 = vector.extract_strided_slice %107 {offsets = [0, 0], sizes = [6, 256], strides = [1, 1]} : vector<10x256xf32> to vector<6x256xf32>
    %119 = arith.mulf %117, %118 : vector<6x256xf32>
    %120 = arith.subf %116, %119 : vector<6x256xf32>
    %121 = arith.addf %115, %11 : vector<6x256xf32>
    %122 = tpu.reciprocal %121 {approx = true} : vector<6x256xf32> -> vector<6x256xf32>
    %123 = arith.mulf %120, %122 : vector<6x256xf32>
    %124 = arith.index_cast %c4_i32 : i32 to index
    %c0_45 = arith.constant 0 : index
    %c0_46 = arith.constant 0 : index
    %125 = vector.load %arg9[%124, %c0_45, %c0_46] : memref<8x6x256xf32, #tpu.memory_space<vmem>>, vector<1x6x256xf32>
    %126 = vector.shape_cast %125 : vector<1x6x256xf32> to vector<6x256xf32>
    %127 = vector.shape_cast %123 : vector<6x256xf32> to vector<1x6x256xf32>
    tpu.vector_store %arg9[%124, %c0_45, %c0_46], %127 {strides = array<i32>} : memref<8x6x256xf32, #tpu.memory_space<vmem>>, vector<1x6x256xf32>,
    %c5_i32 = arith.constant 5 : i32
    %128 = arith.index_cast %c5_i32 : i32 to index
    %c0_47 = arith.constant 0 : index
    %c0_48 = arith.constant 0 : index
    %129 = vector.load %arg1[%128, %c0_47, %c0_48] : memref<8x10x256xf32, #tpu.memory_space<vmem>>, vector<1x10x256xf32>
    %130 = vector.shape_cast %129 : vector<1x10x256xf32> to vector<10x256xf32>
    %cst_49 = arith.constant dense<0.000000e+00> : vector<32x256xf32>
    %131 = tpu.matmul %0, %130, %cst_49 {dimension_numbers = #tpu.dot_dimension_numbers<[1], [0], [0], [1], [0, 0, 1, 1], [], []>} : vector<32x10xf32>, vector<10x256xf32>, vector<32x256xf32> -> vector<32x256xf32>
    %cst_50 = arith.constant dense<0.000000e+00> : vector<32x256xf32>
    %132 = tpu.matmul %1, %112, %cst_50 {dimension_numbers = #tpu.dot_dimension_numbers<[1], [0], [0], [1], [0, 0, 1, 1], [], []>} : vector<32x32xf32>, vector<32x256xf32>, vector<32x256xf32> -> vector<32x256xf32>
    %133 = arith.addf %131, %132 : vector<32x256xf32>
    %134 = arith.addf %133, %5 : vector<32x256xf32>
    %135 = math.tanh %134 : vector<32x256xf32>
    %cst_51 = arith.constant dense<0.000000e+00> : vector<24x256xf32>
    %136 = tpu.matmul %2, %135, %cst_51 {dimension_numbers = #tpu.dot_dimension_numbers<[1], [0], [0], [1], [0, 0, 1, 1], [], []>} : vector<24x32xf32>, vector<32x256xf32>, vector<24x256xf32> -> vector<24x256xf32>
    %137 = arith.addf %136, %8 : vector<24x256xf32>
    %138 = vector.extract_strided_slice %137 {offsets = [0, 0], sizes = [6, 256], strides = [1, 1]} : vector<24x256xf32> to vector<6x256xf32>
    %139 = vector.extract_strided_slice %137 {offsets = [8, 0], sizes = [6, 256], strides = [1, 1]} : vector<24x256xf32> to vector<6x256xf32>
    %140 = vector.extract_strided_slice %137 {offsets = [16, 0], sizes = [6, 256], strides = [1, 1]} : vector<24x256xf32> to vector<6x256xf32>
    %141 = vector.extract_strided_slice %130 {offsets = [0, 0], sizes = [6, 256], strides = [1, 1]} : vector<10x256xf32> to vector<6x256xf32>
    %142 = arith.mulf %140, %141 : vector<6x256xf32>
    %143 = arith.subf %139, %142 : vector<6x256xf32>
    %144 = arith.addf %138, %11 : vector<6x256xf32>
    %145 = tpu.reciprocal %144 {approx = true} : vector<6x256xf32> -> vector<6x256xf32>
    %146 = arith.mulf %143, %145 : vector<6x256xf32>
    %147 = arith.index_cast %c5_i32 : i32 to index
    %c0_52 = arith.constant 0 : index
    %c0_53 = arith.constant 0 : index
    %148 = vector.load %arg9[%147, %c0_52, %c0_53] : memref<8x6x256xf32, #tpu.memory_space<vmem>>, vector<1x6x256xf32>
    %149 = vector.shape_cast %148 : vector<1x6x256xf32> to vector<6x256xf32>
    %150 = vector.shape_cast %146 : vector<6x256xf32> to vector<1x6x256xf32>
    tpu.vector_store %arg9[%147, %c0_52, %c0_53], %150 {strides = array<i32>} : memref<8x6x256xf32, #tpu.memory_space<vmem>>, vector<1x6x256xf32>,
    %c6_i32 = arith.constant 6 : i32
    %151 = arith.index_cast %c6_i32 : i32 to index
    %c0_54 = arith.constant 0 : index
    %c0_55 = arith.constant 0 : index
    %152 = vector.load %arg1[%151, %c0_54, %c0_55] : memref<8x10x256xf32, #tpu.memory_space<vmem>>, vector<1x10x256xf32>
    %153 = vector.shape_cast %152 : vector<1x10x256xf32> to vector<10x256xf32>
    %cst_56 = arith.constant dense<0.000000e+00> : vector<32x256xf32>
    %154 = tpu.matmul %0, %153, %cst_56 {dimension_numbers = #tpu.dot_dimension_numbers<[1], [0], [0], [1], [0, 0, 1, 1], [], []>} : vector<32x10xf32>, vector<10x256xf32>, vector<32x256xf32> -> vector<32x256xf32>
    %cst_57 = arith.constant dense<0.000000e+00> : vector<32x256xf32>
    %155 = tpu.matmul %1, %135, %cst_57 {dimension_numbers = #tpu.dot_dimension_numbers<[1], [0], [0], [1], [0, 0, 1, 1], [], []>} : vector<32x32xf32>, vector<32x256xf32>, vector<32x256xf32> -> vector<32x256xf32>
    %156 = arith.addf %154, %155 : vector<32x256xf32>
    %157 = arith.addf %156, %5 : vector<32x256xf32>
    %158 = math.tanh %157 : vector<32x256xf32>
    %cst_58 = arith.constant dense<0.000000e+00> : vector<24x256xf32>
    %159 = tpu.matmul %2, %158, %cst_58 {dimension_numbers = #tpu.dot_dimension_numbers<[1], [0], [0], [1], [0, 0, 1, 1], [], []>} : vector<24x32xf32>, vector<32x256xf32>, vector<24x256xf32> -> vector<24x256xf32>
    %160 = arith.addf %159, %8 : vector<24x256xf32>
    %161 = vector.extract_strided_slice %160 {offsets = [0, 0], sizes = [6, 256], strides = [1, 1]} : vector<24x256xf32> to vector<6x256xf32>
    %162 = vector.extract_strided_slice %160 {offsets = [8, 0], sizes = [6, 256], strides = [1, 1]} : vector<24x256xf32> to vector<6x256xf32>
    %163 = vector.extract_strided_slice %160 {offsets = [16, 0], sizes = [6, 256], strides = [1, 1]} : vector<24x256xf32> to vector<6x256xf32>
    %164 = vector.extract_strided_slice %153 {offsets = [0, 0], sizes = [6, 256], strides = [1, 1]} : vector<10x256xf32> to vector<6x256xf32>
    %165 = arith.mulf %163, %164 : vector<6x256xf32>
    %166 = arith.subf %162, %165 : vector<6x256xf32>
    %167 = arith.addf %161, %11 : vector<6x256xf32>
    %168 = tpu.reciprocal %167 {approx = true} : vector<6x256xf32> -> vector<6x256xf32>
    %169 = arith.mulf %166, %168 : vector<6x256xf32>
    %170 = arith.index_cast %c6_i32 : i32 to index
    %c0_59 = arith.constant 0 : index
    %c0_60 = arith.constant 0 : index
    %171 = vector.load %arg9[%170, %c0_59, %c0_60] : memref<8x6x256xf32, #tpu.memory_space<vmem>>, vector<1x6x256xf32>
    %172 = vector.shape_cast %171 : vector<1x6x256xf32> to vector<6x256xf32>
    %173 = vector.shape_cast %169 : vector<6x256xf32> to vector<1x6x256xf32>
    tpu.vector_store %arg9[%170, %c0_59, %c0_60], %173 {strides = array<i32>} : memref<8x6x256xf32, #tpu.memory_space<vmem>>, vector<1x6x256xf32>,
    %c7_i32 = arith.constant 7 : i32
    %174 = arith.index_cast %c7_i32 : i32 to index
    %c0_61 = arith.constant 0 : index
    %c0_62 = arith.constant 0 : index
    %175 = vector.load %arg1[%174, %c0_61, %c0_62] : memref<8x10x256xf32, #tpu.memory_space<vmem>>, vector<1x10x256xf32>
    %176 = vector.shape_cast %175 : vector<1x10x256xf32> to vector<10x256xf32>
    %cst_63 = arith.constant dense<0.000000e+00> : vector<32x256xf32>
    %177 = tpu.matmul %0, %176, %cst_63 {dimension_numbers = #tpu.dot_dimension_numbers<[1], [0], [0], [1], [0, 0, 1, 1], [], []>} : vector<32x10xf32>, vector<10x256xf32>, vector<32x256xf32> -> vector<32x256xf32>
    %cst_64 = arith.constant dense<0.000000e+00> : vector<32x256xf32>
    %178 = tpu.matmul %1, %158, %cst_64 {dimension_numbers = #tpu.dot_dimension_numbers<[1], [0], [0], [1], [0, 0, 1, 1], [], []>} : vector<32x32xf32>, vector<32x256xf32>, vector<32x256xf32> -> vector<32x256xf32>
    %179 = arith.addf %177, %178 : vector<32x256xf32>
    %180 = arith.addf %179, %5 : vector<32x256xf32>
    %181 = math.tanh %180 : vector<32x256xf32>
    %cst_65 = arith.constant dense<0.000000e+00> : vector<24x256xf32>
    %182 = tpu.matmul %2, %181, %cst_65 {dimension_numbers = #tpu.dot_dimension_numbers<[1], [0], [0], [1], [0, 0, 1, 1], [], []>} : vector<24x32xf32>, vector<32x256xf32>, vector<24x256xf32> -> vector<24x256xf32>
    %183 = arith.addf %182, %8 : vector<24x256xf32>
    %184 = vector.extract_strided_slice %183 {offsets = [0, 0], sizes = [6, 256], strides = [1, 1]} : vector<24x256xf32> to vector<6x256xf32>
    %185 = vector.extract_strided_slice %183 {offsets = [8, 0], sizes = [6, 256], strides = [1, 1]} : vector<24x256xf32> to vector<6x256xf32>
    %186 = vector.extract_strided_slice %183 {offsets = [16, 0], sizes = [6, 256], strides = [1, 1]} : vector<24x256xf32> to vector<6x256xf32>
    %187 = vector.extract_strided_slice %176 {offsets = [0, 0], sizes = [6, 256], strides = [1, 1]} : vector<10x256xf32> to vector<6x256xf32>
    %188 = arith.mulf %186, %187 : vector<6x256xf32>
    %189 = arith.subf %185, %188 : vector<6x256xf32>
    %190 = arith.addf %184, %11 : vector<6x256xf32>
    %191 = tpu.reciprocal %190 {approx = true} : vector<6x256xf32> -> vector<6x256xf32>
    %192 = arith.mulf %189, %191 : vector<6x256xf32>
    %193 = arith.index_cast %c7_i32 : i32 to index
    %c0_66 = arith.constant 0 : index
    %c0_67 = arith.constant 0 : index
    %194 = vector.load %arg9[%193, %c0_66, %c0_67] : memref<8x6x256xf32, #tpu.memory_space<vmem>>, vector<1x6x256xf32>
    %195 = vector.shape_cast %194 : vector<1x6x256xf32> to vector<6x256xf32>
    %196 = vector.shape_cast %192 : vector<6x256xf32> to vector<1x6x256xf32>
    tpu.vector_store %arg9[%193, %c0_66, %c0_67], %196 {strides = array<i32>} : memref<8x6x256xf32, #tpu.memory_space<vmem>>, vector<1x6x256xf32>,
    %c8_i32 = arith.constant 8 : i32
    %c0_68 = arith.constant 0 : index
    %c0_69 = arith.constant 0 : index
    %197 = vector.load %arg10[%c0_68, %c0_69] : memref<32x256xf32, #tpu.memory_space<vmem>>, vector<32x256xf32>
    tpu.vector_store %arg10[%c0_68, %c0_69], %181 {strides = array<i32>} : memref<32x256xf32, #tpu.memory_space<vmem>>, vector<32x256xf32>,
    return
  }
  func.func @transform_0(%arg0: i32) -> (i32, i32, i32) {
    %c0_i32 = arith.constant 0 : i32
    %c0_i32_0 = arith.constant 0 : i32
    %c0_i32_1 = arith.constant 0 : i32
    return %c0_i32, %c0_i32_0, %arg0 : i32, i32, i32
  }
  func.func @transform_1(%arg0: i32) -> (i32, i32) {
    %c0_i32 = arith.constant 0 : i32
    %c0_i32_0 = arith.constant 0 : i32
    %c0_i32_1 = arith.constant 0 : i32
    return %c0_i32, %c0_i32_0 : i32, i32
  }
  func.func @transform_2(%arg0: i32) -> (i32, i32) {
    %c0_i32 = arith.constant 0 : i32
    %c0_i32_0 = arith.constant 0 : i32
    %c0_i32_1 = arith.constant 0 : i32
    return %c0_i32, %c0_i32_0 : i32, i32
  }
  func.func @transform_3(%arg0: i32) -> (i32, i32) {
    %c0_i32 = arith.constant 0 : i32
    %c0_i32_0 = arith.constant 0 : i32
    %c0_i32_1 = arith.constant 0 : i32
    return %c0_i32, %c0_i32_0 : i32, i32
  }
  func.func @transform_4(%arg0: i32) -> (i32, i32) {
    %c0_i32 = arith.constant 0 : i32
    %c0_i32_0 = arith.constant 0 : i32
    %c0_i32_1 = arith.constant 0 : i32
    return %c0_i32, %c0_i32_0 : i32, i32
  }
  func.func @transform_5(%arg0: i32) -> (i32, i32) {
    %c0_i32 = arith.constant 0 : i32
    %c0_i32_0 = arith.constant 0 : i32
    %c0_i32_1 = arith.constant 0 : i32
    return %c0_i32, %c0_i32_0 : i32, i32
  }
  func.func @transform_6(%arg0: i32) -> (i32, i32) {
    %c0_i32 = arith.constant 0 : i32
    %c0_i32_0 = arith.constant 0 : i32
    %c0_i32_1 = arith.constant 0 : i32
    return %c0_i32, %c0_i32_0 : i32, i32
  }
  func.func @transform_7(%arg0: i32) -> (i32, i32) {
    %c0_i32 = arith.constant 0 : i32
    %c0_i32_0 = arith.constant 0 : i32
    return %c0_i32, %arg0 : i32, i32
  }
  func.func @transform_8(%arg0: i32) -> (i32, i32, i32) {
    %c0_i32 = arith.constant 0 : i32
    %c0_i32_0 = arith.constant 0 : i32
    %c0_i32_1 = arith.constant 0 : i32
    return %c0_i32, %c0_i32_0, %arg0 : i32, i32, i32
  }
  func.func @transform_9(%arg0: i32) -> (i32, i32) {
    %c0_i32 = arith.constant 0 : i32
    %c0_i32_0 = arith.constant 0 : i32
    return %c0_i32, %arg0 : i32, i32
  }
}

</mosaic_0001>

<llo_original>
// kernel: tpu_custom_call.1
$region0: #{tpu_custom_call.1}
  #allocation0 [shape = 'u32[]', space=smem, size = 0x4, offset = 0x4, fixed_abs, tag = 'smem constant byte address 0x4 - core index']
  #allocation1 [shape = 'u32[144,128]{1,0:T(1,128)}', space=vmem, size = 0x12000, scoped, tag = 'internal scratch']
  %s0 = inlined_call_operand.vmem [shape: f32[8,10,256], index: 0, kind: input, shape index: {}]
  %s1 = inlined_call_operand.vmem [shape: f32[32,10], index: 1, kind: input, shape index: {}]
  %s2 = inlined_call_operand.vmem [shape: f32[32,32], index: 2, kind: input, shape index: {}]
  %s3 = inlined_call_operand.vmem [shape: f32[32,1], index: 3, kind: input, shape index: {}]
  %s4 = inlined_call_operand.vmem [shape: f32[24,32], index: 4, kind: input, shape index: {}]
  %s5 = inlined_call_operand.vmem [shape: f32[24,1], index: 5, kind: input, shape index: {}]
  %s6 = inlined_call_operand.vmem [shape: f32[6,1], index: 6, kind: input, shape index: {}]
  %s7 = inlined_call_operand.vmem [shape: f32[32,256], index: 7, kind: input, shape index: {}]
  %s8 = inlined_call_operand.vmem [shape: f32[8,6,256], index: 8, kind: output, shape index: {0}]
  %s9 = inlined_call_operand.hbm [shape: f32[32,256], index: 9, kind: output, shape index: {1}]
  %10 = xla_tuple %s8, %s9
  %s11 = sld [smem:[#allocation0]]
  $region50: #{tpu_custom_call.1} parent=0
    _
  %s13 = ssub.s32 1, %s11
  %s14 = scalar_select 0, %s13, %s11
  $region1: #{tpu_custom_call.1} parent=0
    #allocation2 [shape = 'u8[32768]{0}', space=vmem, size = 0x8000, scoped, tag = 'output window, operand 1, single buffered']
    #allocation3 [shape = 's32[1]{0}', space=sflag, size = 0x4, scoped, tag = 'scoped memory for tpu_custom_call.1']
    %15 = vsyncpa [#allocation3], 0
    // Predicated region
    $region2: #{tpu_custom_call.1} parent=1 // pred_check
      _
    $region3: #{tpu_custom_call.1} parent=1 // pred_check_branch
      %17 = sbr.rel (0) target = $region5
    $region4: #{tpu_custom_call.1} parent=1 // pred_region
      _
    $region5: #{tpu_custom_call.1} parent=1 // pred_fallthru
      _
    // Predicated region
    $region6: #{tpu_custom_call.1} parent=1 // pred_check
      _
    $region7: #{tpu_custom_call.1} parent=1 // pred_check_branch
      %19 = sbr.rel (0) target = $region9
    $region8: #{tpu_custom_call.1} parent=1 // pred_region
      _
    $region9: #{tpu_custom_call.1} parent=1 // pred_fallthru
      _
    // Predicated region
    $region10: #{tpu_custom_call.1} parent=1 // pred_check
      _
    $region11: #{tpu_custom_call.1} parent=1 // pred_check_branch
      %21 = sbr.rel (0) target = $region13
    $region12: #{tpu_custom_call.1} parent=1 // pred_region
      _
    $region13: #{tpu_custom_call.1} parent=1 // pred_fallthru
      _
    // Predicated region
    $region14: #{tpu_custom_call.1} parent=1 // pred_check
      _
    $region15: #{tpu_custom_call.1} parent=1 // pred_check_branch
      %23 = sbr.rel (0) target = $region17
    $region16: #{tpu_custom_call.1} parent=1 // pred_region
      _
    $region17: #{tpu_custom_call.1} parent=1 // pred_fallthru
      _
    // Predicated region
    $region18: #{tpu_custom_call.1} parent=1 // pred_check
      _
    $region19: #{tpu_custom_call.1} parent=1 // pred_check_branch
      %25 = sbr.rel (0) target = $region21
    $region20: #{tpu_custom_call.1} parent=1 // pred_region
      _
    $region21: #{tpu_custom_call.1} parent=1 // pred_fallthru
      _
    // Predicated region
    $region22: #{tpu_custom_call.1} parent=1 // pred_check
      _
    $region23: #{tpu_custom_call.1} parent=1 // pred_check_branch
      %27 = sbr.rel (0) target = $region25
    $region24: #{tpu_custom_call.1} parent=1 // pred_region
      _
    $region25: #{tpu_custom_call.1} parent=1 // pred_fallthru
      _
    // Predicated region
    $region26: #{tpu_custom_call.1} parent=1 // pred_check
      _
    $region27: #{tpu_custom_call.1} parent=1 // pred_check_branch
      %29 = sbr.rel (0) target = $region29
    $region28: #{tpu_custom_call.1} parent=1 // pred_region
      _
    $region29: #{tpu_custom_call.1} parent=1 // pred_fallthru
      _
    // Predicated region
    $region30: #{tpu_custom_call.1} parent=1 // pred_check
      _
    $region31: #{tpu_custom_call.1} parent=1 // pred_check_branch
      %31 = sbr.rel (0) target = $region33
    $region32: #{tpu_custom_call.1} parent=1 // pred_region
      _
    $region33: #{tpu_custom_call.1} parent=1 // pred_fallthru
      _
    %v32 = vld [vmem:[%s1] sm:$0xff]
    %v33 = vld [vmem:[%s1 + $0x8] sm:$0xff]
    %v34 = vld [vmem:[%s1 + $0x10] sm:$0xff]
    %v35 = vld [vmem:[%s1 + $0x18] sm:$0xff]
    %v36 = vld [vmem:[%s2] sm:$0xff]
    %v37 = vld [vmem:[%s2 + $0x8] sm:$0xff]
    %v38 = vld [vmem:[%s2 + $0x10] sm:$0xff]
    %v39 = vld [vmem:[%s2 + $0x18] sm:$0xff]
    %v40 = vld [vmem:[%s4] sm:$0xff]
    %v41 = vld [vmem:[%s4 + $0x8] sm:$0xff]
    %v42 = vld [vmem:[%s4 + $0x10] sm:$0xff]
    %v43 = vld [vmem:[%s3] sm:$0xff]
    %v44 = vld [vmem:[%s3 + $0x8] sm:$0xff]
    %v45 = vld [vmem:[%s3 + $0x10] sm:$0xff]
    %v46 = vld [vmem:[%s3 + $0x18] sm:$0xff]
    %48 = vset.pattern.permute.xlu0 0
    %49 = vperm.xlu0 %48, %v43
    %v50 = vpop.permute.xlu0 %49
    %53 = vset.pattern.permute.xlu0 0
    %54 = vperm.xlu0 %53, %v44
    %v55 = vpop.permute.xlu0 %54
    %58 = vset.pattern.permute.xlu0 0
    %59 = vperm.xlu0 %58, %v45
    %v60 = vpop.permute.xlu0 %59
    %63 = vset.pattern.permute.xlu0 0
    %64 = vperm.xlu0 %63, %v46
    %v65 = vpop.permute.xlu0 %64
    %v67 = vld [vmem:[%s5] sm:$0xff]
    %v68 = vld [vmem:[%s5 + $0x8] sm:$0xff]
    %v69 = vld [vmem:[%s5 + $0x10] sm:$0xff]
    %71 = vset.pattern.permute.xlu0 0
    %72 = vperm.xlu0 %71, %v67
    %v73 = vpop.permute.xlu0 %72
    %76 = vset.pattern.permute.xlu0 0
    %77 = vperm.xlu0 %76, %v68
    %v78 = vpop.permute.xlu0 %77
    %81 = vset.pattern.permute.xlu0 0
    %82 = vperm.xlu0 %81, %v69
    %v83 = vpop.permute.xlu0 %82
    %v85 = vld [vmem:[%s6] sm:$0x3f]
    %87 = vset.pattern.permute.xlu0 0
    %88 = vperm.xlu0 %87, %v85
    %v89 = vpop.permute.xlu0 %88
    %v91 = vld [vmem:[%s7] sm:$0xff]
    %v92 = vld [vmem:[%s7 + $0x8] sm:$0xff]
    %v93 = vld [vmem:[%s7 + $0x10] sm:$0xff]
    %v94 = vld [vmem:[%s7 + $0x18] sm:$0xff]
    %v95 = vld [vmem:[%s7 + $0x20] sm:$0xff]
    %v96 = vld [vmem:[%s7 + $0x28] sm:$0xff]
    %v97 = vld [vmem:[%s7 + $0x30] sm:$0xff]
    %v98 = vld [vmem:[%s7 + $0x38] sm:$0xff]
    %v99 = vld [vmem:[%s0] sm:$0xff]
    %v100 = vld [vmem:[%s0 + $0x8] sm:$0xff]
    %v101 = vld [vmem:[%s0 + $0x10] sm:$0x3]
    %v102 = vld [vmem:[%s0 + $0x18] sm:$0x3]
    %vm103 = vcmask 261120
    %v105 = vsel %vm103, %v36, 0
    %v108 = vsel %vm103, %v37, 0
    %v111 = vsel %vm103, %v38, 0
    %v114 = vsel %vm103, %v39, 0
    %116 = vmatprep.subr.mxu0 0.0
    %117 = vmatpush1.msra.mxu0 0.0
    %118 = vmatprep.subr.mxu0 0.0
    %119 = vmatpush1.msra.mxu0 0.0
    %120 = vmatprep.subr.mxu0 0.0
    %121 = vmatpush1.msra.mxu0 0.0
    %122 = vmatprep.subr.mxu0 0.0
    %123 = vmatpush1.msra.mxu0 0.0
    %124 = vmatprep.subr.mxu0 0.0
    %125 = vmatpush1.msra.mxu0 0.0
    %126 = vmatprep.subr.mxu0 0.0
    %127 = vmatpush1.msra.mxu0 0.0
    %128 = vmatprep.subr.mxu0 0.0
    %129 = vmatpush1.msra.mxu0 0.0
    %130 = vmatprep.subr.mxu0 0.0
    %131 = vmatpush1.msra.mxu0 0.0
    %132 = vmatprep.subr.mxu0 0.0
    %133 = vmatpush1.msra.mxu0 0.0
    %134 = vmatprep.subr.mxu0 0.0
    %135 = vmatpush1.msra.mxu0 0.0
    %136 = vmatprep.subr.mxu0 0.0
    %137 = vmatpush1.msra.mxu0 0.0
    %138 = vmatprep.subr.mxu0 0.0
    %139 = vmatpush1.msra.mxu0 0.0
    %140 = vmatprep.subr.mxu0 %v98
    %141 = vmatpush1.msra.mxu0 %v97
    %142 = vmatprep.subr.mxu0 %v96
    %143 = vmatpush1.msra.mxu0 %v95
    %144 = vmatprep.subr.mxu0 %v94
    %145 = vmatpush1.msra.mxu0 %v93
    %146 = vmatprep.subr.mxu0 %v92
    %147 = vmatpush1.msra.mxu0 %v91
    %148 = vmatprep.subr.mxu0 0.0
    %149 = vmatpush2.msra.mxu0 0.0
    %150 = vmatprep.subr.mxu0 0.0
    %151 = vmatpush2.msra.mxu0 0.0
    %152 = vmatprep.subr.mxu0 0.0
    %153 = vmatpush2.msra.mxu0 0.0
    %154 = vmatprep.subr.mxu0 0.0
    %155 = vmatpush2.msra.mxu0 0.0
    %156 = vmatprep.subr.mxu0 0.0
    %157 = vmatpush2.msra.mxu0 0.0
    %158 = vmatprep.subr.mxu0 0.0
    %159 = vmatpush2.msra.mxu0 0.0
    %160 = vmatprep.subr.mxu0 0.0
    %161 = vmatpush2.msra.mxu0 0.0
    %162 = vmatprep.subr.mxu0 0.0
    %163 = vmatpush2.msra.mxu0 0.0
    %164 = vmatprep.subr.mxu0 0.0
    %165 = vmatpush2.msra.mxu0 0.0
    %166 = vmatprep.subr.mxu0 0.0
    %167 = vmatpush2.msra.mxu0 0.0
    %168 = vmatprep.subr.mxu0 0.0
    %169 = vmatpush2.msra.mxu0 0.0
    %170 = vmatprep.subr.mxu0 0.0
    %171 = vmatpush2.msra.mxu0 0.0
    %172 = vmatprep.subr.mxu0 0.0
    %173 = vmatpush2.msra.mxu0 0.0
    %174 = vmatprep.subr.mxu0 0.0
    %175 = vmatpush2.msra.mxu0 0.0
    %176 = vmatprep.subr.mxu0 0.0
    %177 = vmatpush2.msra.mxu0 0.0
    %178 = vmatprep.subr.mxu0 0.0
    %179 = vmatpush2.msra.mxu0 0.0
    %180 = vmatprep.mubr.f32.mxu0 0.0
    %181 = vmatmul.mubr.f32.gmra.mxu0 %v105
    %v182 = vpop.f32.mrf.mxu0
    %v183 = vadd.f32 0.0, %v182
    %v184 = vpop.f32.mrf.mxu0
    %v185 = vadd.f32 0.0, %v184
    %186 = vmatprep.mubr.f32.mxu0 0.0
    %187 = vmatmul.mubr.f32.gmra.mxu0 %v108
    %v188 = vpop.f32.mrf.mxu0
    %v189 = vadd.f32 0.0, %v188
    %v190 = vpop.f32.mrf.mxu0
    %v191 = vadd.f32 0.0, %v190
    %192 = vmatprep.mubr.f32.mxu0 0.0
    %193 = vmatmul.mubr.f32.gmra.mxu0 %v111
    %v194 = vpop.f32.mrf.mxu0
    %v195 = vadd.f32 0.0, %v194
    %v196 = vpop.f32.mrf.mxu0
    %v197 = vadd.f32 0.0, %v196
    %198 = vmatprep.mubr.f32.mxu0 0.0
    %199 = vmatmul.mubr.f32.gmra.mxu0 %v114
    %v200 = vpop.f32.mrf.mxu0
    %v201 = vadd.f32 0.0, %v200
    %v202 = vpop.f32.mrf.mxu0
    %v203 = vadd.f32 0.0, %v202
    %204 = vdwg.mxu0
    %vm205 = vcmask 80896
    %v207 = vsel %vm205, %v32, 0
    %v210 = vsel %vm205, %v33, 0
    %v213 = vsel %vm205, %v34, 0
    %v216 = vsel %vm205, %v35, 0
    %vm218 = vcmask 1041408
    %v220 = vsel %vm218, %v101, 0
    %v223 = vsel %vm218, %v102, 0
    %225 = vmatprep.subr.mxu0 0.0
    %226 = vmatpush1.msra.mxu0 0.0
    %227 = vmatprep.subr.mxu0 0.0
    %228 = vmatpush1.msra.mxu0 0.0
    %229 = vmatprep.subr.mxu0 0.0
    %230 = vmatpush1.msra.mxu0 0.0
    %231 = vmatprep.subr.mxu0 0.0
    %232 = vmatpush1.msra.mxu0 0.0
    %233 = vmatprep.subr.mxu0 0.0
    %234 = vmatpush1.msra.mxu0 0.0
    %235 = vmatprep.subr.mxu0 0.0
    %236 = vmatpush1.msra.mxu0 0.0
    %237 = vmatprep.subr.mxu0 0.0
    %238 = vmatpush1.msra.mxu0 0.0
    %239 = vmatprep.subr.mxu0 0.0
    %240 = vmatpush1.msra.mxu0 0.0
    %241 = vmatprep.subr.mxu0 0.0
    %242 = vmatpush1.msra.mxu0 0.0
    %243 = vmatprep.subr.mxu0 0.0
    %244 = vmatpush1.msra.mxu0 0.0
    %245 = vmatprep.subr.mxu0 0.0
    %246 = vmatpush1.msra.mxu0 0.0
    %247 = vmatprep.subr.mxu0 0.0
    %248 = vmatpush1.msra.mxu0 0.0
    %249 = vmatprep.subr.mxu0 0.0
    %250 = vmatpush1.msra.mxu0 0.0
    %251 = vmatprep.subr.mxu0 0.0
    %252 = vmatpush1.msra.mxu0 0.0
    %253 = vmatprep.subr.mxu0 %v223
    %254 = vmatpush1.msra.mxu0 %v220
    %255 = vmatprep.subr.mxu0 %v100
    %256 = vmatpush1.msra.mxu0 %v99
    %257 = vmatprep.subr.mxu0 0.0
    %258 = vmatpush2.msra.mxu0 0.0
    %259 = vmatprep.subr.mxu0 0.0
    %260 = vmatpush2.msra.mxu0 0.0
    %261 = vmatprep.subr.mxu0 0.0
    %262 = vmatpush2.msra.mxu0 0.0
    %263 = vmatprep.subr.mxu0 0.0
    %264 = vmatpush2.msra.mxu0 0.0
    %265 = vmatprep.subr.mxu0 0.0
    %266 = vmatpush2.msra.mxu0 0.0
    %267 = vmatprep.subr.mxu0 0.0
    %268 = vmatpush2.msra.mxu0 0.0
    %269 = vmatprep.subr.mxu0 0.0
    %270 = vmatpush2.msra.mxu0 0.0
    %271 = vmatprep.subr.mxu0 0.0
    %272 = vmatpush2.msra.mxu0 0.0
    %273 = vmatprep.subr.mxu0 0.0
    %274 = vmatpush2.msra.mxu0 0.0
    %275 = vmatprep.subr.mxu0 0.0
    %276 = vmatpush2.msra.mxu0 0.0
    %277 = vmatprep.subr.mxu0 0.0
    %278 = vmatpush2.msra.mxu0 0.0
    %279 = vmatprep.subr.mxu0 0.0
    %280 = vmatpush2.msra.mxu0 0.0
    %281 = vmatprep.subr.mxu0 0.0
    %282 = vmatpush2.msra.mxu0 0.0
    %283 = vmatprep.subr.mxu0 0.0
    %284 = vmatpush2.msra.mxu0 0.0
    %285 = vmatprep.subr.mxu0 0.0
    %286 = vmatpush2.msra.mxu0 0.0
    %287 = vmatprep.subr.mxu0 0.0
    %288 = vmatpush2.msra.mxu0 0.0
    %289 = vmatprep.mubr.f32.mxu0 0.0
    %290 = vmatmul.mubr.f32.gmra.mxu0 %v207
    %v291 = vpop.f32.mrf.mxu0
    %v292 = vadd.f32 %v183, %v291
    %v293 = vpop.f32.mrf.mxu0
    %v294 = vadd.f32 %v185, %v293
    %295 = vmatprep.mubr.f32.mxu0 0.0
    %296 = vmatmul.mubr.f32.gmra.mxu0 %v210
    %v297 = vpop.f32.mrf.mxu0
    %v298 = vadd.f32 %v189, %v297
    %v299 = vpop.f32.mrf.mxu0
    %v300 = vadd.f32 %v191, %v299
    %301 = vmatprep.mubr.f32.mxu0 0.0
    %302 = vmatmul.mubr.f32.gmra.mxu0 %v213
    %v303 = vpop.f32.mrf.mxu0
    %v304 = vadd.f32 %v195, %v303
    %v305 = vpop.f32.mrf.mxu0
    %v306 = vadd.f32 %v197, %v305
    %307 = vmatprep.mubr.f32.mxu0 0.0
    %308 = vmatmul.mubr.f32.gmra.mxu0 %v216
    %v309 = vpop.f32.mrf.mxu0
    %v310 = vadd.f32 %v201, %v309
    %v311 = vpop.f32.mrf.mxu0
    %v312 = vadd.f32 %v203, %v311
    %313 = vdwg.mxu0
    %v314 = vadd.f32 %v292, %v50
    %v315 = vadd.f32 %v294, %v50
    %v316 = vadd.f32 %v298, %v55
    %v317 = vadd.f32 %v300, %v55
    %v318 = vadd.f32 %v304, %v60
    %v319 = vadd.f32 %v306, %v60
    %v320 = vadd.f32 %v310, %v65
    %v321 = vadd.f32 %v312, %v65
    %v322 = vtanh.pop %v314
    %v323 = vtanh.pop %v315
    %v324 = vtanh.pop %v316
    %v325 = vtanh.pop %v317
    %v326 = vtanh.pop %v318
    %v327 = vtanh.pop %v319
    %v328 = vtanh.pop %v320
    %v329 = vtanh.pop %v321
    %v331 = vsel %vm103, %v40, 0
    %v334 = vsel %vm103, %v41, 0
    %v337 = vsel %vm103, %v42, 0
    %339 = vmatprep.subr.mxu0 0.0
    %340 = vmatpush1.msra.mxu0 0.0
    %341 = vmatprep.subr.mxu0 0.0
    %342 = vmatpush1.msra.mxu0 0.0
    %343 = vmatprep.subr.mxu0 0.0
    %344 = vmatpush1.msra.mxu0 0.0
    %345 = vmatprep.subr.mxu0 0.0
    %346 = vmatpush1.msra.mxu0 0.0
    %347 = vmatprep.subr.mxu0 0.0
    %348 = vmatpush1.msra.mxu0 0.0
    %349 = vmatprep.subr.mxu0 0.0
    %350 = vmatpush1.msra.mxu0 0.0
    %351 = vmatprep.subr.mxu0 0.0
    %352 = vmatpush1.msra.mxu0 0.0
    %353 = vmatprep.subr.mxu0 0.0
    %354 = vmatpush1.msra.mxu0 0.0
    %355 = vmatprep.subr.mxu0 0.0
    %356 = vmatpush1.msra.mxu0 0.0
    %357 = vmatprep.subr.mxu0 0.0
    %358 = vmatpush1.msra.mxu0 0.0
    %359 = vmatprep.subr.mxu0 0.0
    %360 = vmatpush1.msra.mxu0 0.0
    %361 = vmatprep.subr.mxu0 0.0
    %362 = vmatpush1.msra.mxu0 0.0
    %363 = vmatprep.subr.mxu0 %v329
    %364 = vmatpush1.msra.mxu0 %v328
    %365 = vmatprep.subr.mxu0 %v327
    %366 = vmatpush1.msra.mxu0 %v326
    %367 = vmatprep.subr.mxu0 %v325
    %368 = vmatpush1.msra.mxu0 %v324
    %369 = vmatprep.subr.mxu0 %v323
    %370 = vmatpush1.msra.mxu0 %v322
    %371 = vmatprep.subr.mxu0 0.0
    %372 = vmatpush2.msra.mxu0 0.0
    %373 = vmatprep.subr.mxu0 0.0
    %374 = vmatpush2.msra.mxu0 0.0
    %375 = vmatprep.subr.mxu0 0.0
    %376 = vmatpush2.msra.mxu0 0.0
    %377 = vmatprep.subr.mxu0 0.0
    %378 = vmatpush2.msra.mxu0 0.0
    %379 = vmatprep.subr.mxu0 0.0
    %380 = vmatpush2.msra.mxu0 0.0
    %381 = vmatprep.subr.mxu0 0.0
    %382 = vmatpush2.msra.mxu0 0.0
    %383 = vmatprep.subr.mxu0 0.0
    %384 = vmatpush2.msra.mxu0 0.0
    %385 = vmatprep.subr.mxu0 0.0
    %386 = vmatpush2.msra.mxu0 0.0
    %387 = vmatprep.subr.mxu0 0.0
    %388 = vmatpush2.msra.mxu0 0.0
    %389 = vmatprep.subr.mxu0 0.0
    %390 = vmatpush2.msra.mxu0 0.0
    %391 = vmatprep.subr.mxu0 0.0
    %392 = vmatpush2.msra.mxu0 0.0
    %393 = vmatprep.subr.mxu0 0.0
    %394 = vmatpush2.msra.mxu0 0.0
    %395 = vmatprep.subr.mxu0 0.0
    %396 = vmatpush2.msra.mxu0 0.0
    %397 = vmatprep.subr.mxu0 0.0
    %398 = vmatpush2.msra.mxu0 0.0
    %399 = vmatprep.subr.mxu0 0.0
    %400 = vmatpush2.msra.mxu0 0.0
    %401 = vmatprep.subr.mxu0 0.0
    %402 = vmatpush2.msra.mxu0 0.0
    %403 = vmatprep.mubr.f32.mxu0 0.0
    %404 = vmatmul.mubr.f32.gmra.mxu0 %v331
    %v405 = vpop.f32.mrf.mxu0
    %v406 = vadd.f32 %v73, %v405
    %v407 = vpop.f32.mrf.mxu0
    %v408 = vadd.f32 %v73, %v407
    %409 = vmatprep.mubr.f32.mxu0 0.0
    %410 = vmatmul.mubr.f32.gmra.mxu0 %v334
    %v411 = vpop.f32.mrf.mxu0
    %v412 = vadd.f32 %v78, %v411
    %v413 = vpop.f32.mrf.mxu0
    %v414 = vadd.f32 %v78, %v413
    %415 = vmatprep.mubr.f32.mxu0 0.0
    %416 = vmatmul.mubr.f32.gmra.mxu0 %v337
    %v417 = vpop.f32.mrf.mxu0
    %v418 = vadd.f32 %v83, %v417
    %v419 = vpop.f32.mrf.mxu0
    %v420 = vadd.f32 %v83, %v419
    %421 = vdwg.mxu0
    %v422 = vmul.f32 %v418, %v99
    %v423 = vmul.f32 %v420, %v100
    %v424 = vsub.f32 %v412, %v422
    %v425 = vsub.f32 %v414, %v423
    %v426 = vadd.f32 %v406, %v89
    %v427 = vadd.f32 %v408, %v89
    %v428 = vrcp.pop %v426
    %v429 = vrcp.pop %v427
    %v430 = vmul.f32 %v424, %v428
    %v431 = vmul.f32 %v425, %v429
    %432 = vst [vmem:[%s8] sm:$0x3f] %v430
    %433 = vst [vmem:[%s8 + $0x8] sm:$0x3f] %v431
    %s434 = scalar_lea.vmem %s0, 32
    %v435 = vld [vmem:[%s434] sm:$0xff]
    %v436 = vld [vmem:[%s434 + $0x8] sm:$0xff]
    %v437 = vld [vmem:[%s434 + $0x10] sm:$0x3]
    %v438 = vld [vmem:[%s434 + $0x18] sm:$0x3]
    %439 = vmatprep.subr.mxu0 0.0
    %440 = vmatpush1.msra.mxu0 0.0
    %441 = vmatprep.subr.mxu0 0.0
    %442 = vmatpush1.msra.mxu0 0.0
    %443 = vmatprep.subr.mxu0 0.0
    %444 = vmatpush1.msra.mxu0 0.0
    %445 = vmatprep.subr.mxu0 0.0
    %446 = vmatpush1.msra.mxu0 0.0
    %447 = vmatprep.subr.mxu0 0.0
    %448 = vmatpush1.msra.mxu0 0.0
    %449 = vmatprep.subr.mxu0 0.0
    %450 = vmatpush1.msra.mxu0 0.0
    %451 = vmatprep.subr.mxu0 0.0
    %452 = vmatpush1.msra.mxu0 0.0
    %453 = vmatprep.subr.mxu0 0.0
    %454 = vmatpush1.msra.mxu0 0.0
    %455 = vmatprep.subr.mxu0 0.0
    %456 = vmatpush1.msra.mxu0 0.0
    %457 = vmatprep.subr.mxu0 0.0
    %458 = vmatpush1.msra.mxu0 0.0
    %459 = vmatprep.subr.mxu0 0.0
    %460 = vmatpush1.msra.mxu0 0.0
    %461 = vmatprep.subr.mxu0 0.0
    %462 = vmatpush1.msra.mxu0 0.0
    %463 = vmatprep.subr.mxu0 %v329
    %464 = vmatpush1.msra.mxu0 %v328
    %465 = vmatprep.subr.mxu0 %v327
    %466 = vmatpush1.msra.mxu0 %v326
    %467 = vmatprep.subr.mxu0 %v325
    %468 = vmatpush1.msra.mxu0 %v324
    %469 = vmatprep.subr.mxu0 %v323
    %470 = vmatpush1.msra.mxu0 %v322
    %471 = vmatprep.subr.mxu0 0.0
    %472 = vmatpush2.msra.mxu0 0.0
    %473 = vmatprep.subr.mxu0 0.0
    %474 = vmatpush2.msra.mxu0 0.0
    %475 = vmatprep.subr.mxu0 0.0
    %476 = vmatpush2.msra.mxu0 0.0
    %477 = vmatprep.subr.mxu0 0.0
    %478 = vmatpush2.msra.mxu0 0.0
    %479 = vmatprep.subr.mxu0 0.0
    %480 = vmatpush2.msra.mxu0 0.0
    %481 = vmatprep.subr.mxu0 0.0
    %482 = vmatpush2.msra.mxu0 0.0
    %483 = vmatprep.subr.mxu0 0.0
    %484 = vmatpush2.msra.mxu0 0.0
    %485 = vmatprep.subr.mxu0 0.0
    %486 = vmatpush2.msra.mxu0 0.0
    %487 = vmatprep.subr.mxu0 0.0
    %488 = vmatpush2.msra.mxu0 0.0
    %489 = vmatprep.subr.mxu0 0.0
    %490 = vmatpush2.msra.mxu0 0.0
    %491 = vmatprep.subr.mxu0 0.0
    %492 = vmatpush2.msra.mxu0 0.0
    %493 = vmatprep.subr.mxu0 0.0
    %494 = vmatpush2.msra.mxu0 0.0
    %495 = vmatprep.subr.mxu0 0.0
    %496 = vmatpush2.msra.mxu0 0.0
    %497 = vmatprep.subr.mxu0 0.0
    %498 = vmatpush2.msra.mxu0 0.0
    %499 = vmatprep.subr.mxu0 0.0
    %500 = vmatpush2.msra.mxu0 0.0
    %501 = vmatprep.subr.mxu0 0.0
    %502 = vmatpush2.msra.mxu0 0.0
    %503 = vmatprep.mubr.f32.mxu0 0.0
    %504 = vmatmul.mubr.f32.gmra.mxu0 %v105
    %v505 = vpop.f32.mrf.mxu0
    %v506 = vadd.f32 0.0, %v505
    %v507 = vpop.f32.mrf.mxu0
    %v508 = vadd.f32 0.0, %v507
    %509 = vmatprep.mubr.f32.mxu0 0.0
    %510 = vmatmul.mubr.f32.gmra.mxu0 %v108
    %v511 = vpop.f32.mrf.mxu0
    %v512 = vadd.f32 0.0, %v511
    %v513 = vpop.f32.mrf.mxu0
    %v514 = vadd.f32 0.0, %v513
    %515 = vmatprep.mubr.f32.mxu0 0.0
    %516 = vmatmul.mubr.f32.gmra.mxu0 %v111
    %v517 = vpop.f32.mrf.mxu0
    %v518 = vadd.f32 0.0, %v517
    %v519 = vpop.f32.mrf.mxu0
    %v520 = vadd.f32 0.0, %v519
    %521 = vmatprep.mubr.f32.mxu0 0.0
    %522 = vmatmul.mubr.f32.gmra.mxu0 %v114
    %v523 = vpop.f32.mrf.mxu0
    %v524 = vadd.f32 0.0, %v523
    %v525 = vpop.f32.mrf.mxu0
    %v526 = vadd.f32 0.0, %v525
    %527 = vdwg.mxu0
    %v529 = vsel %vm218, %v437, 0
    %v532 = vsel %vm218, %v438, 0
    %534 = vmatprep.subr.mxu0 0.0
    %535 = vmatpush1.msra.mxu0 0.0
    %536 = vmatprep.subr.mxu0 0.0
    %537 = vmatpush1.msra.mxu0 0.0
    %538 = vmatprep.subr.mxu0 0.0
    %539 = vmatpush1.msra.mxu0 0.0
    %540 = vmatprep.subr.mxu0 0.0
    %541 = vmatpush1.msra.mxu0 0.0
    %542 = vmatprep.subr.mxu0 0.0
    %543 = vmatpush1.msra.mxu0 0.0
    %544 = vmatprep.subr.mxu0 0.0
    %545 = vmatpush1.msra.mxu0 0.0
    %546 = vmatprep.subr.mxu0 0.0
    %547 = vmatpush1.msra.mxu0 0.0
    %548 = vmatprep.subr.mxu0 0.0
    %549 = vmatpush1.msra.mxu0 0.0
    %550 = vmatprep.subr.mxu0 0.0
    %551 = vmatpush1.msra.mxu0 0.0
    %552 = vmatprep.subr.mxu0 0.0
    %553 = vmatpush1.msra.mxu0 0.0
    %554 = vmatprep.subr.mxu0 0.0
    %555 = vmatpush1.msra.mxu0 0.0
    %556 = vmatprep.subr.mxu0 0.0
    %557 = vmatpush1.msra.mxu0 0.0
    %558 = vmatprep.subr.mxu0 0.0
    %559 = vmatpush1.msra.mxu0 0.0
    %560 = vmatprep.subr.mxu0 0.0
    %561 = vmatpush1.msra.mxu0 0.0
    %562 = vmatprep.subr.mxu0 %v532
    %563 = vmatpush1.msra.mxu0 %v529
    %564 = vmatprep.subr.mxu0 %v436
    %565 = vmatpush1.msra.mxu0 %v435
    %566 = vmatprep.subr.mxu0 0.0
    %567 = vmatpush2.msra.mxu0 0.0
    %568 = vmatprep.subr.mxu0 0.0
    %569 = vmatpush2.msra.mxu0 0.0
    %570 = vmatprep.subr.mxu0 0.0
    %571 = vmatpush2.msra.mxu0 0.0
    %572 = vmatprep.subr.mxu0 0.0
    %573 = vmatpush2.msra.mxu0 0.0
    %574 = vmatprep.subr.mxu0 0.0
    %575 = vmatpush2.msra.mxu0 0.0
    %576 = vmatprep.subr.mxu0 0.0
    %577 = vmatpush2.msra.mxu0 0.0
    %578 = vmatprep.subr.mxu0 0.0
    %579 = vmatpush2.msra.mxu0 0.0
    %580 = vmatprep.subr.mxu0 0.0
    %581 = vmatpush2.msra.mxu0 0.0
    %582 = vmatprep.subr.mxu0 0.0
    %583 = vmatpush2.msra.mxu0 0.0
    %584 = vmatprep.subr.mxu0 0.0
    %585 = vmatpush2.msra.mxu0 0.0
    %586 = vmatprep.subr.mxu0 0.0
    %587 = vmatpush2.msra.mxu0 0.0
    %588 = vmatprep.subr.mxu0 0.0
    %589 = vmatpush2.msra.mxu0 0.0
    %590 = vmatprep.subr.mxu0 0.0
    %591 = vmatpush2.msra.mxu0 0.0
    %592 = vmatprep.subr.mxu0 0.0
    %593 = vmatpush2.msra.mxu0 0.0
    %594 = vmatprep.subr.mxu0 0.0
    %595 = vmatpush2.msra.mxu0 0.0
    %596 = vmatprep.subr.mxu0 0.0
    %597 = vmatpush2.msra.mxu0 0.0
    %598 = vmatprep.mubr.f32.mxu0 0.0
    %599 = vmatmul.mubr.f32.gmra.mxu0 %v207
    %v600 = vpop.f32.mrf.mxu0
    %v601 = vadd.f32 %v506, %v600
    %v602 = vpop.f32.mrf.mxu0
    %v603 = vadd.f32 %v508, %v602
    %604 = vmatprep.mubr.f32.mxu0 0.0
    %605 = vmatmul.mubr.f32.gmra.mxu0 %v210
    %v606 = vpop.f32.mrf.mxu0
    %v607 = vadd.f32 %v512, %v606
    %v608 = vpop.f32.mrf.mxu0
    %v609 = vadd.f32 %v514, %v608
    %610 = vmatprep.mubr.f32.mxu0 0.0
    %611 = vmatmul.mubr.f32.gmra.mxu0 %v213
    %v612 = vpop.f32.mrf.mxu0
    %v613 = vadd.f32 %v518, %v612
    %v614 = vpop.f32.mrf.mxu0
    %v615 = vadd.f32 %v520, %v614
    %616 = vmatprep.mubr.f32.mxu0 0.0
    %617 = vmatmul.mubr.f32.gmra.mxu0 %v216
    %v618 = vpop.f32.mrf.mxu0
    %v619 = vadd.f32 %v524, %v618
    %v620 = vpop.f32.mrf.mxu0
    %v621 = vadd.f32 %v526, %v620
    %622 = vdwg.mxu0
    %v623 = vadd.f32 %v601, %v50
    %v624 = vadd.f32 %v603, %v50
    %v625 = vadd.f32 %v607, %v55
    %v626 = vadd.f32 %v609, %v55
    %v627 = vadd.f32 %v613, %v60
    %v628 = vadd.f32 %v615, %v60
    %v629 = vadd.f32 %v619, %v65
    %v630 = vadd.f32 %v621, %v65
    %v631 = vtanh.pop %v623
    %v632 = vtanh.pop %v624
    %v633 = vtanh.pop %v625
    %v634 = vtanh.pop %v626
    %v635 = vtanh.pop %v627
    %v636 = vtanh.pop %v628
    %v637 = vtanh.pop %v629
    %v638 = vtanh.pop %v630
    %639 = vmatprep.subr.mxu0 0.0
    %640 = vmatpush1.msra.mxu0 0.0
    %641 = vmatprep.subr.mxu0 0.0
    %642 = vmatpush1.msra.mxu0 0.0
    %643 = vmatprep.subr.mxu0 0.0
    %644 = vmatpush1.msra.mxu0 0.0
    %645 = vmatprep.subr.mxu0 0.0
    %646 = vmatpush1.msra.mxu0 0.0
    %647 = vmatprep.subr.mxu0 0.0
    %648 = vmatpush1.msra.mxu0 0.0
    %649 = vmatprep.subr.mxu0 0.0
    %650 = vmatpush1.msra.mxu0 0.0
    %651 = vmatprep.subr.mxu0 0.0
    %652 = vmatpush1.msra.mxu0 0.0
    %653 = vmatprep.subr.mxu0 0.0
    %654 = vmatpush1.msra.mxu0 0.0
    %655 = vmatprep.subr.mxu0 0.0
    %656 = vmatpush1.msra.mxu0 0.0
    %657 = vmatprep.subr.mxu0 0.0
    %658 = vmatpush1.msra.mxu0 0.0
    %659 = vmatprep.subr.mxu0 0.0
    %660 = vmatpush1.msra.mxu0 0.0
    %661 = vmatprep.subr.mxu0 0.0
    %662 = vmatpush1.msra.mxu0 0.0
    %663 = vmatprep.subr.mxu0 %v638
    %664 = vmatpush1.msra.mxu0 %v637
    %665 = vmatprep.subr.mxu0 %v636
    %666 = vmatpush1.msra.mxu0 %v635
    %667 = vmatprep.subr.mxu0 %v634
    %668 = vmatpush1.msra.mxu0 %v633
    %669 = vmatprep.subr.mxu0 %v632
    %670 = vmatpush1.msra.mxu0 %v631
    %671 = vmatprep.subr.mxu0 0.0
    %672 = vmatpush2.msra.mxu0 0.0
    %673 = vmatprep.subr.mxu0 0.0
    %674 = vmatpush2.msra.mxu0 0.0
    %675 = vmatprep.subr.mxu0 0.0
    %676 = vmatpush2.msra.mxu0 0.0
    %677 = vmatprep.subr.mxu0 0.0
    %678 = vmatpush2.msra.mxu0 0.0
    %679 = vmatprep.subr.mxu0 0.0
    %680 = vmatpush2.msra.mxu0 0.0
    %681 = vmatprep.subr.mxu0 0.0
    %682 = vmatpush2.msra.mxu0 0.0
    %683 = vmatprep.subr.mxu0 0.0
    %684 = vmatpush2.msra.mxu0 0.0
    %685 = vmatprep.subr.mxu0 0.0
    %686 = vmatpush2.msra.mxu0 0.0
    %687 = vmatprep.subr.mxu0 0.0
    %688 = vmatpush2.msra.mxu0 0.0
    %689 = vmatprep.subr.mxu0 0.0
    %690 = vmatpush2.msra.mxu0 0.0
    %691 = vmatprep.subr.mxu0 0.0
    %692 = vmatpush2.msra.mxu0 0.0
    %693 = vmatprep.subr.mxu0 0.0
    %694 = vmatpush2.msra.mxu0 0.0
    %695 = vmatprep.subr.mxu0 0.0
    %696 = vmatpush2.msra.mxu0 0.0
    %697 = vmatprep.subr.mxu0 0.0
    %698 = vmatpush2.msra.mxu0 0.0
    %699 = vmatprep.subr.mxu0 0.0
    %700 = vmatpush2.msra.mxu0 0.0
    %701 = vmatprep.subr.mxu0 0.0
    %702 = vmatpush2.msra.mxu0 0.0
    %703 = vmatprep.mubr.f32.mxu0 0.0
    %704 = vmatmul.mubr.f32.gmra.mxu0 %v331
    %v705 = vpop.f32.mrf.mxu0
    %v706 = vadd.f32 %v73, %v705
    %v707 = vpop.f32.mrf.mxu0
    %v708 = vadd.f32 %v73, %v707
    %709 = vmatprep.mubr.f32.mxu0 0.0
    %710 = vmatmul.mubr.f32.gmra.mxu0 %v334
    %v711 = vpop.f32.mrf.mxu0
    %v712 = vadd.f32 %v78, %v711
    %v713 = vpop.f32.mrf.mxu0
    %v714 = vadd.f32 %v78, %v713
    %715 = vmatprep.mubr.f32.mxu0 0.0
    %716 = vmatmul.mubr.f32.gmra.mxu0 %v337
    %v717 = vpop.f32.mrf.mxu0
    %v718 = vadd.f32 %v83, %v717
    %v719 = vpop.f32.mrf.mxu0
    %v720 = vadd.f32 %v83, %v719
    %721 = vdwg.mxu0
    %v722 = vmul.f32 %v718, %v435
    %v723 = vmul.f32 %v720, %v436
    %v724 = vsub.f32 %v712, %v722
    %v725 = vsub.f32 %v714, %v723
    %v726 = vadd.f32 %v706, %v89
    %v727 = vadd.f32 %v708, %v89
    %v728 = vrcp.pop %v726
    %v729 = vrcp.pop %v727
    %v730 = vmul.f32 %v724, %v728
    %v731 = vmul.f32 %v725, %v729
    %s732 = scalar_lea.vmem %s8, 16
    %733 = vst [vmem:[%s732] sm:$0x3f] %v730
    %734 = vst [vmem:[%s732 + $0x8] sm:$0x3f] %v731
    %s735 = scalar_lea.vmem %s0, 64
    %v736 = vld [vmem:[%s735] sm:$0xff]
    %v737 = vld [vmem:[%s735 + $0x8] sm:$0xff]
    %v738 = vld [vmem:[%s735 + $0x10] sm:$0x3]
    %v739 = vld [vmem:[%s735 + $0x18] sm:$0x3]
    %740 = vmatprep.subr.mxu0 0.0
    %741 = vmatpush1.msra.mxu0 0.0
    %742 = vmatprep.subr.mxu0 0.0
    %743 = vmatpush1.msra.mxu0 0.0
    %744 = vmatprep.subr.mxu0 0.0
    %745 = vmatpush1.msra.mxu0 0.0
    %746 = vmatprep.subr.mxu0 0.0
    %747 = vmatpush1.msra.mxu0 0.0
    %748 = vmatprep.subr.mxu0 0.0
    %749 = vmatpush1.msra.mxu0 0.0
    %750 = vmatprep.subr.mxu0 0.0
    %751 = vmatpush1.msra.mxu0 0.0
    %752 = vmatprep.subr.mxu0 0.0
    %753 = vmatpush1.msra.mxu0 0.0
    %754 = vmatprep.subr.mxu0 0.0
    %755 = vmatpush1.msra.mxu0 0.0
    %756 = vmatprep.subr.mxu0 0.0
    %757 = vmatpush1.msra.mxu0 0.0
    %758 = vmatprep.subr.mxu0 0.0
    %759 = vmatpush1.msra.mxu0 0.0
    %760 = vmatprep.subr.mxu0 0.0
    %761 = vmatpush1.msra.mxu0 0.0
    %762 = vmatprep.subr.mxu0 0.0
    %763 = vmatpush1.msra.mxu0 0.0
    %764 = vmatprep.subr.mxu0 %v638
    %765 = vmatpush1.msra.mxu0 %v637
    %766 = vmatprep.subr.mxu0 %v636
    %767 = vmatpush1.msra.mxu0 %v635
    %768 = vmatprep.subr.mxu0 %v634
    %769 = vmatpush1.msra.mxu0 %v633
    %770 = vmatprep.subr.mxu0 %v632
    %771 = vmatpush1.msra.mxu0 %v631
    %772 = vmatprep.subr.mxu0 0.0
    %773 = vmatpush2.msra.mxu0 0.0
    %774 = vmatprep.subr.mxu0 0.0
    %775 = vmatpush2.msra.mxu0 0.0
    %776 = vmatprep.subr.mxu0 0.0
    %777 = vmatpush2.msra.mxu0 0.0
    %778 = vmatprep.subr.mxu0 0.0
    %779 = vmatpush2.msra.mxu0 0.0
    %780 = vmatprep.subr.mxu0 0.0
    %781 = vmatpush2.msra.mxu0 0.0
    %782 = vmatprep.subr.mxu0 0.0
    %783 = vmatpush2.msra.mxu0 0.0
    %784 = vmatprep.subr.mxu0 0.0
    %785 = vmatpush2.msra.mxu0 0.0
    %786 = vmatprep.subr.mxu0 0.0
    %787 = vmatpush2.msra.mxu0 0.0
    %788 = vmatprep.subr.mxu0 0.0
    %789 = vmatpush2.msra.mxu0 0.0
    %790 = vmatprep.subr.mxu0 0.0
    %791 = vmatpush2.msra.mxu0 0.0
    %792 = vmatprep.subr.mxu0 0.0
    %793 = vmatpush2.msra.mxu0 0.0
    %794 = vmatprep.subr.mxu0 0.0
    %795 = vmatpush2.msra.mxu0 0.0
    %796 = vmatprep.subr.mxu0 0.0
    %797 = vmatpush2.msra.mxu0 0.0
    %798 = vmatprep.subr.mxu0 0.0
    %799 = vmatpush2.msra.mxu0 0.0
    %800 = vmatprep.subr.mxu0 0.0
    %801 = vmatpush2.msra.mxu0 0.0
    %802 = vmatprep.subr.mxu0 0.0
    %803 = vmatpush2.msra.mxu0 0.0
    %804 = vmatprep.mubr.f32.mxu0 0.0
    %805 = vmatmul.mubr.f32.gmra.mxu0 %v105
    %v806 = vpop.f32.mrf.mxu0
    %v807 = vadd.f32 0.0, %v806
    %v808 = vpop.f32.mrf.mxu0
    %v809 = vadd.f32 0.0, %v808
    %810 = vmatprep.mubr.f32.mxu0 0.0
    %811 = vmatmul.mubr.f32.gmra.mxu0 %v108
    %v812 = vpop.f32.mrf.mxu0
    %v813 = vadd.f32 0.0, %v812
    %v814 = vpop.f32.mrf.mxu0
    %v815 = vadd.f32 0.0, %v814
    %816 = vmatprep.mubr.f32.mxu0 0.0
    %817 = vmatmul.mubr.f32.gmra.mxu0 %v111
    %v818 = vpop.f32.mrf.mxu0
    %v819 = vadd.f32 0.0, %v818
    %v820 = vpop.f32.mrf.mxu0
    %v821 = vadd.f32 0.0, %v820
    %822 = vmatprep.mubr.f32.mxu0 0.0
    %823 = vmatmul.mubr.f32.gmra.mxu0 %v114
    %v824 = vpop.f32.mrf.mxu0
    %v825 = vadd.f32 0.0, %v824
    %v826 = vpop.f32.mrf.mxu0
    %v827 = vadd.f32 0.0, %v826
    %828 = vdwg.mxu0
    %v830 = vsel %vm218, %v738, 0
    %v833 = vsel %vm218, %v739, 0
    %835 = vmatprep.subr.mxu0 0.0
    %836 = vmatpush1.msra.mxu0 0.0
    %837 = vmatprep.subr.mxu0 0.0
    %838 = vmatpush1.msra.mxu0 0.0
    %839 = vmatprep.subr.mxu0 0.0
    %840 = vmatpush1.msra.mxu0 0.0
    %841 = vmatprep.subr.mxu0 0.0
    %842 = vmatpush1.msra.mxu0 0.0
    %843 = vmatprep.subr.mxu0 0.0
    %844 = vmatpush1.msra.mxu0 0.0
    %845 = vmatprep.subr.mxu0 0.0
    %846 = vmatpush1.msra.mxu0 0.0
    %847 = vmatprep.subr.mxu0 0.0
    %848 = vmatpush1.msra.mxu0 0.0
    %849 = vmatprep.subr.mxu0 0.0
    %850 = vmatpush1.msra.mxu0 0.0
    %851 = vmatprep.subr.mxu0 0.0
    %852 = vmatpush1.msra.mxu0 0.0
    %853 = vmatprep.subr.mxu0 0.0
    %854 = vmatpush1.msra.mxu0 0.0
    %855 = vmatprep.subr.mxu0 0.0
    %856 = vmatpush1.msra.mxu0 0.0
    %857 = vmatprep.subr.mxu0 0.0
    %858 = vmatpush1.msra.mxu0 0.0
    %859 = vmatprep.subr.mxu0 0.0
    %860 = vmatpush1.msra.mxu0 0.0
    %861 = vmatprep.subr.mxu0 0.0
    %862 = vmatpush1.msra.mxu0 0.0
    %863 = vmatprep.subr.mxu0 %v833
    %864 = vmatpush1.msra.mxu0 %v830
    %865 = vmatprep.subr.mxu0 %v737
    %866 = vmatpush1.msra.mxu0 %v736
    %867 = vmatprep.subr.mxu0 0.0
    %868 = vmatpush2.msra.mxu0 0.0
    %869 = vmatprep.subr.mxu0 0.0
    %870 = vmatpush2.msra.mxu0 0.0
    %871 = vmatprep.subr.mxu0 0.0
    %872 = vmatpush2.msra.mxu0 0.0
    %873 = vmatprep.subr.mxu0 0.0
    %874 = vmatpush2.msra.mxu0 0.0
    %875 = vmatprep.subr.mxu0 0.0
    %876 = vmatpush2.msra.mxu0 0.0
    %877 = vmatprep.subr.mxu0 0.0
    %878 = vmatpush2.msra.mxu0 0.0
    %879 = vmatprep.subr.mxu0 0.0
    %880 = vmatpush2.msra.mxu0 0.0
    %881 = vmatprep.subr.mxu0 0.0
    %882 = vmatpush2.msra.mxu0 0.0
    %883 = vmatprep.subr.mxu0 0.0
    %884 = vmatpush2.msra.mxu0 0.0
    %885 = vmatprep.subr.mxu0 0.0
    %886 = vmatpush2.msra.mxu0 0.0
    %887 = vmatprep.subr.mxu0 0.0
    %888 = vmatpush2.msra.mxu0 0.0
    %889 = vmatprep.subr.mxu0 0.0
    %890 = vmatpush2.msra.mxu0 0.0
    %891 = vmatprep.subr.mxu0 0.0
    %892 = vmatpush2.msra.mxu0 0.0
    %893 = vmatprep.subr.mxu0 0.0
    %894 = vmatpush2.msra.mxu0 0.0
    %895 = vmatprep.subr.mxu0 0.0
    %896 = vmatpush2.msra.mxu0 0.0
    %897 = vmatprep.subr.mxu0 0.0
    %898 = vmatpush2.msra.mxu0 0.0
    %899 = vmatprep.mubr.f32.mxu0 0.0
    %900 = vmatmul.mubr.f32.gmra.mxu0 %v207
    %v901 = vpop.f32.mrf.mxu0
    %v902 = vadd.f32 %v807, %v901
    %v903 = vpop.f32.mrf.mxu0
    %v904 = vadd.f32 %v809, %v903
    %905 = vmatprep.mubr.f32.mxu0 0.0
    %906 = vmatmul.mubr.f32.gmra.mxu0 %v210
    %v907 = vpop.f32.mrf.mxu0
    %v908 = vadd.f32 %v813, %v907
    %v909 = vpop.f32.mrf.mxu0
    %v910 = vadd.f32 %v815, %v909
    %911 = vmatprep.mubr.f32.mxu0 0.0
    %912 = vmatmul.mubr.f32.gmra.mxu0 %v213
    %v913 = vpop.f32.mrf.mxu0
    %v914 = vadd.f32 %v819, %v913
    %v915 = vpop.f32.mrf.mxu0
    %v916 = vadd.f32 %v821, %v915
    %917 = vmatprep.mubr.f32.mxu0 0.0
    %918 = vmatmul.mubr.f32.gmra.mxu0 %v216
    %v919 = vpop.f32.mrf.mxu0
    %v920 = vadd.f32 %v825, %v919
    %v921 = vpop.f32.mrf.mxu0
    %v922 = vadd.f32 %v827, %v921
    %923 = vdwg.mxu0
    %v924 = vadd.f32 %v902, %v50
    %v925 = vadd.f32 %v904, %v50
    %v926 = vadd.f32 %v908, %v55
    %v927 = vadd.f32 %v910, %v55
    %v928 = vadd.f32 %v914, %v60
    %v929 = vadd.f32 %v916, %v60
    %v930 = vadd.f32 %v920, %v65
    %v931 = vadd.f32 %v922, %v65
    %v932 = vtanh.pop %v924
    %v933 = vtanh.pop %v925
    %v934 = vtanh.pop %v926
    %v935 = vtanh.pop %v927
    %v936 = vtanh.pop %v928
    %v937 = vtanh.pop %v929
    %v938 = vtanh.pop %v930
    %v939 = vtanh.pop %v931
    %940 = vmatprep.subr.mxu0 0.0
    %941 = vmatpush1.msra.mxu0 0.0
    %942 = vmatprep.subr.mxu0 0.0
    %943 = vmatpush1.msra.mxu0 0.0
    %944 = vmatprep.subr.mxu0 0.0
    %945 = vmatpush1.msra.mxu0 0.0
    %946 = vmatprep.subr.mxu0 0.0
    %947 = vmatpush1.msra.mxu0 0.0
    %948 = vmatprep.subr.mxu0 0.0
    %949 = vmatpush1.msra.mxu0 0.0
    %950 = vmatprep.subr.mxu0 0.0
    %951 = vmatpush1.msra.mxu0 0.0
    %952 = vmatprep.subr.mxu0 0.0
    %953 = vmatpush1.msra.mxu0 0.0
    %954 = vmatprep.subr.mxu0 0.0
    %955 = vmatpush1.msra.mxu0 0.0
    %956 = vmatprep.subr.mxu0 0.0
    %957 = vmatpush1.msra.mxu0 0.0
    %958 = vmatprep.subr.mxu0 0.0
    %959 = vmatpush1.msra.mxu0 0.0
    %960 = vmatprep.subr.mxu0 0.0
    %961 = vmatpush1.msra.mxu0 0.0
    %962 = vmatprep.subr.mxu0 0.0
    %963 = vmatpush1.msra.mxu0 0.0
    %964 = vmatprep.subr.mxu0 %v939
    %965 = vmatpush1.msra.mxu0 %v938
    %966 = vmatprep.subr.mxu0 %v937
    %967 = vmatpush1.msra.mxu0 %v936
    %968 = vmatprep.subr.mxu0 %v935
    %969 = vmatpush1.msra.mxu0 %v934
    %970 = vmatprep.subr.mxu0 %v933
    %971 = vmatpush1.msra.mxu0 %v932
    %972 = vmatprep.subr.mxu0 0.0
    %973 = vmatpush2.msra.mxu0 0.0
    %974 = vmatprep.subr.mxu0 0.0
    %975 = vmatpush2.msra.mxu0 0.0
    %976 = vmatprep.subr.mxu0 0.0
    %977 = vmatpush2.msra.mxu0 0.0
    %978 = vmatprep.subr.mxu0 0.0
    %979 = vmatpush2.msra.mxu0 0.0
    %980 = vmatprep.subr.mxu0 0.0
    %981 = vmatpush2.msra.mxu0 0.0
    %982 = vmatprep.subr.mxu0 0.0
    %983 = vmatpush2.msra.mxu0 0.0
    %984 = vmatprep.subr.mxu0 0.0
    %985 = vmatpush2.msra.mxu0 0.0
    %986 = vmatprep.subr.mxu0 0.0
    %987 = vmatpush2.msra.mxu0 0.0
    %988 = vmatprep.subr.mxu0 0.0
    %989 = vmatpush2.msra.mxu0 0.0
    %990 = vmatprep.subr.mxu0 0.0
    %991 = vmatpush2.msra.mxu0 0.0
    %992 = vmatprep.subr.mxu0 0.0
    %993 = vmatpush2.msra.mxu0 0.0
    %994 = vmatprep.subr.mxu0 0.0
    %995 = vmatpush2.msra.mxu0 0.0
    %996 = vmatprep.subr.mxu0 0.0
    %997 = vmatpush2.msra.mxu0 0.0
    %998 = vmatprep.subr.mxu0 0.0
    %999 = vmatpush2.msra.mxu0 0.0
    %1000 = vmatprep.subr.mxu0 0.0
    %1001 = vmatpush2.msra.mxu0 0.0
    %1002 = vmatprep.subr.mxu0 0.0
    %1003 = vmatpush2.msra.mxu0 0.0
    %1004 = vmatprep.mubr.f32.mxu0 0.0
    %1005 = vmatmul.mubr.f32.gmra.mxu0 %v331
    %v1006 = vpop.f32.mrf.mxu0
    %v1007 = vadd.f32 %v73, %v1006
    %v1008 = vpop.f32.mrf.mxu0
    %v1009 = vadd.f32 %v73, %v1008
    %1010 = vmatprep.mubr.f32.mxu0 0.0
    %1011 = vmatmul.mubr.f32.gmra.mxu0 %v334
    %v1012 = vpop.f32.mrf.mxu0
    %v1013 = vadd.f32 %v78, %v1012
    %v1014 = vpop.f32.mrf.mxu0
    %v1015 = vadd.f32 %v78, %v1014
    %1016 = vmatprep.mubr.f32.mxu0 0.0
    %1017 = vmatmul.mubr.f32.gmra.mxu0 %v337
    %v1018 = vpop.f32.mrf.mxu0
    %v1019 = vadd.f32 %v83, %v1018
    %v1020 = vpop.f32.mrf.mxu0
    %v1021 = vadd.f32 %v83, %v1020
    %1022 = vdwg.mxu0
    %v1023 = vmul.f32 %v1019, %v736
    %v1024 = vmul.f32 %v1021, %v737
    %v1025 = vsub.f32 %v1013, %v1023
    %v1026 = vsub.f32 %v1015, %v1024
    %v1027 = vadd.f32 %v1007, %v89
    %v1028 = vadd.f32 %v1009, %v89
    %v1029 = vrcp.pop %v1027
    %v1030 = vrcp.pop %v1028
    %v1031 = vmul.f32 %v1025, %v1029
    %v1032 = vmul.f32 %v1026, %v1030
    %s1033 = scalar_lea.vmem %s8, 32
    %1034 = vst [vmem:[%s1033] sm:$0x3f] %v1031
    %1035 = vst [vmem:[%s1033 + $0x8] sm:$0x3f] %v1032
    %s1036 = scalar_lea.vmem %s0, 96
    %v1037 = vld [vmem:[%s1036] sm:$0xff]
    %v1038 = vld [vmem:[%s1036 + $0x8] sm:$0xff]
    %v1039 = vld [vmem:[%s1036 + $0x10] sm:$0x3]
    %v1040 = vld [vmem:[%s1036 + $0x18] sm:$0x3]
    %1041 = vmatprep.subr.mxu0 0.0
    %1042 = vmatpush1.msra.mxu0 0.0
    %1043 = vmatprep.subr.mxu0 0.0
    %1044 = vmatpush1.msra.mxu0 0.0
    %1045 = vmatprep.subr.mxu0 0.0
    %1046 = vmatpush1.msra.mxu0 0.0
    %1047 = vmatprep.subr.mxu0 0.0
    %1048 = vmatpush1.msra.mxu0 0.0
    %1049 = vmatprep.subr.mxu0 0.0
    %1050 = vmatpush1.msra.mxu0 0.0
    %1051 = vmatprep.subr.mxu0 0.0
    %1052 = vmatpush1.msra.mxu0 0.0
    %1053 = vmatprep.subr.mxu0 0.0
    %1054 = vmatpush1.msra.mxu0 0.0
    %1055 = vmatprep.subr.mxu0 0.0
    %1056 = vmatpush1.msra.mxu0 0.0
    %1057 = vmatprep.subr.mxu0 0.0
    %1058 = vmatpush1.msra.mxu0 0.0
    %1059 = vmatprep.subr.mxu0 0.0
    %1060 = vmatpush1.msra.mxu0 0.0
    %1061 = vmatprep.subr.mxu0 0.0
    %1062 = vmatpush1.msra.mxu0 0.0
    %1063 = vmatprep.subr.mxu0 0.0
    %1064 = vmatpush1.msra.mxu0 0.0
    %1065 = vmatprep.subr.mxu0 %v939
    %1066 = vmatpush1.msra.mxu0 %v938
    %1067 = vmatprep.subr.mxu0 %v937
    %1068 = vmatpush1.msra.mxu0 %v936
    %1069 = vmatprep.subr.mxu0 %v935
    %1070 = vmatpush1.msra.mxu0 %v934
    %1071 = vmatprep.subr.mxu0 %v933
    %1072 = vmatpush1.msra.mxu0 %v932
    %1073 = vmatprep.subr.mxu0 0.0
    %1074 = vmatpush2.msra.mxu0 0.0
    %1075 = vmatprep.subr.mxu0 0.0
    %1076 = vmatpush2.msra.mxu0 0.0
    %1077 = vmatprep.subr.mxu0 0.0
    %1078 = vmatpush2.msra.mxu0 0.0
    %1079 = vmatprep.subr.mxu0 0.0
    %1080 = vmatpush2.msra.mxu0 0.0
    %1081 = vmatprep.subr.mxu0 0.0
    %1082 = vmatpush2.msra.mxu0 0.0
    %1083 = vmatprep.subr.mxu0 0.0
    %1084 = vmatpush2.msra.mxu0 0.0
    %1085 = vmatprep.subr.mxu0 0.0
    %1086 = vmatpush2.msra.mxu0 0.0
    %1087 = vmatprep.subr.mxu0 0.0
    %1088 = vmatpush2.msra.mxu0 0.0
    %1089 = vmatprep.subr.mxu0 0.0
    %1090 = vmatpush2.msra.mxu0 0.0
    %1091 = vmatprep.subr.mxu0 0.0
    %1092 = vmatpush2.msra.mxu0 0.0
    %1093 = vmatprep.subr.mxu0 0.0
    %1094 = vmatpush2.msra.mxu0 0.0
    %1095 = vmatprep.subr.mxu0 0.0
    %1096 = vmatpush2.msra.mxu0 0.0
    %1097 = vmatprep.subr.mxu0 0.0
    %1098 = vmatpush2.msra.mxu0 0.0
    %1099 = vmatprep.subr.mxu0 0.0
    %1100 = vmatpush2.msra.mxu0 0.0
    %1101 = vmatprep.subr.mxu0 0.0
    %1102 = vmatpush2.msra.mxu0 0.0
    %1103 = vmatprep.subr.mxu0 0.0
    %1104 = vmatpush2.msra.mxu0 0.0
    %1105 = vmatprep.mubr.f32.mxu0 0.0
    %1106 = vmatmul.mubr.f32.gmra.mxu0 %v105
    %v1107 = vpop.f32.mrf.mxu0
    %v1108 = vadd.f32 0.0, %v1107
    %v1109 = vpop.f32.mrf.mxu0
    %v1110 = vadd.f32 0.0, %v1109
    %1111 = vmatprep.mubr.f32.mxu0 0.0
    %1112 = vmatmul.mubr.f32.gmra.mxu0 %v108
    %v1113 = vpop.f32.mrf.mxu0
    %v1114 = vadd.f32 0.0, %v1113
    %v1115 = vpop.f32.mrf.mxu0
    %v1116 = vadd.f32 0.0, %v1115
    %1117 = vmatprep.mubr.f32.mxu0 0.0
    %1118 = vmatmul.mubr.f32.gmra.mxu0 %v111
    %v1119 = vpop.f32.mrf.mxu0
    %v1120 = vadd.f32 0.0, %v1119
    %v1121 = vpop.f32.mrf.mxu0
    %v1122 = vadd.f32 0.0, %v1121
    %1123 = vmatprep.mubr.f32.mxu0 0.0
    %1124 = vmatmul.mubr.f32.gmra.mxu0 %v114
    %v1125 = vpop.f32.mrf.mxu0
    %v1126 = vadd.f32 0.0, %v1125
    %v1127 = vpop.f32.mrf.mxu0
    %v1128 = vadd.f32 0.0, %v1127
    %1129 = vdwg.mxu0
    %v1131 = vsel %vm218, %v1039, 0
    %v1134 = vsel %vm218, %v1040, 0
    %1136 = vmatprep.subr.mxu0 0.0
    %1137 = vmatpush1.msra.mxu0 0.0
    %1138 = vmatprep.subr.mxu0 0.0
    %1139 = vmatpush1.msra.mxu0 0.0
    %1140 = vmatprep.subr.mxu0 0.0
    %1141 = vmatpush1.msra.mxu0 0.0
    %1142 = vmatprep.subr.mxu0 0.0
    %1143 = vmatpush1.msra.mxu0 0.0
    %1144 = vmatprep.subr.mxu0 0.0
    %1145 = vmatpush1.msra.mxu0 0.0
    %1146 = vmatprep.subr.mxu0 0.0
    %1147 = vmatpush1.msra.mxu0 0.0
    %1148 = vmatprep.subr.mxu0 0.0
    %1149 = vmatpush1.msra.mxu0 0.0
    %1150 = vmatprep.subr.mxu0 0.0
    %1151 = vmatpush1.msra.mxu0 0.0
    %1152 = vmatprep.subr.mxu0 0.0
    %1153 = vmatpush1.msra.mxu0 0.0
    %1154 = vmatprep.subr.mxu0 0.0
    %1155 = vmatpush1.msra.mxu0 0.0
    %1156 = vmatprep.subr.mxu0 0.0
    %1157 = vmatpush1.msra.mxu0 0.0
    %1158 = vmatprep.subr.mxu0 0.0
    %1159 = vmatpush1.msra.mxu0 0.0
    %1160 = vmatprep.subr.mxu0 0.0
    %1161 = vmatpush1.msra.mxu0 0.0
    %1162 = vmatprep.subr.mxu0 0.0
    %1163 = vmatpush1.msra.mxu0 0.0
    %1164 = vmatprep.subr.mxu0 %v1134
    %1165 = vmatpush1.msra.mxu0 %v1131
    %1166 = vmatprep.subr.mxu0 %v1038
    %1167 = vmatpush1.msra.mxu0 %v1037
    %1168 = vmatprep.subr.mxu0 0.0
    %1169 = vmatpush2.msra.mxu0 0.0
    %1170 = vmatprep.subr.mxu0 0.0
    %1171 = vmatpush2.msra.mxu0 0.0
    %1172 = vmatprep.subr.mxu0 0.0
    %1173 = vmatpush2.msra.mxu0 0.0
    %1174 = vmatprep.subr.mxu0 0.0
    %1175 = vmatpush2.msra.mxu0 0.0
    %1176 = vmatprep.subr.mxu0 0.0
    %1177 = vmatpush2.msra.mxu0 0.0
    %1178 = vmatprep.subr.mxu0 0.0
    %1179 = vmatpush2.msra.mxu0 0.0
    %1180 = vmatprep.subr.mxu0 0.0
    %1181 = vmatpush2.msra.mxu0 0.0
    %1182 = vmatprep.subr.mxu0 0.0
    %1183 = vmatpush2.msra.mxu0 0.0
    %1184 = vmatprep.subr.mxu0 0.0
    %1185 = vmatpush2.msra.mxu0 0.0
    %1186 = vmatprep.subr.mxu0 0.0
    %1187 = vmatpush2.msra.mxu0 0.0
    %1188 = vmatprep.subr.mxu0 0.0
    %1189 = vmatpush2.msra.mxu0 0.0
    %1190 = vmatprep.subr.mxu0 0.0
    %1191 = vmatpush2.msra.mxu0 0.0
    %1192 = vmatprep.subr.mxu0 0.0
    %1193 = vmatpush2.msra.mxu0 0.0
    %1194 = vmatprep.subr.mxu0 0.0
    %1195 = vmatpush2.msra.mxu0 0.0
    %1196 = vmatprep.subr.mxu0 0.0
    %1197 = vmatpush2.msra.mxu0 0.0
    %1198 = vmatprep.subr.mxu0 0.0
    %1199 = vmatpush2.msra.mxu0 0.0
    %1200 = vmatprep.mubr.f32.mxu0 0.0
    %1201 = vmatmul.mubr.f32.gmra.mxu0 %v207
    %v1202 = vpop.f32.mrf.mxu0
    %v1203 = vadd.f32 %v1108, %v1202
    %v1204 = vpop.f32.mrf.mxu0
    %v1205 = vadd.f32 %v1110, %v1204
    %1206 = vmatprep.mubr.f32.mxu0 0.0
    %1207 = vmatmul.mubr.f32.gmra.mxu0 %v210
    %v1208 = vpop.f32.mrf.mxu0
    %v1209 = vadd.f32 %v1114, %v1208
    %v1210 = vpop.f32.mrf.mxu0
    %v1211 = vadd.f32 %v1116, %v1210
    %1212 = vmatprep.mubr.f32.mxu0 0.0
    %1213 = vmatmul.mubr.f32.gmra.mxu0 %v213
    %v1214 = vpop.f32.mrf.mxu0
    %v1215 = vadd.f32 %v1120, %v1214
    %v1216 = vpop.f32.mrf.mxu0
    %v1217 = vadd.f32 %v1122, %v1216
    %1218 = vmatprep.mubr.f32.mxu0 0.0
    %1219 = vmatmul.mubr.f32.gmra.mxu0 %v216
    %v1220 = vpop.f32.mrf.mxu0
    %v1221 = vadd.f32 %v1126, %v1220
    %v1222 = vpop.f32.mrf.mxu0
    %v1223 = vadd.f32 %v1128, %v1222
    %1224 = vdwg.mxu0
    %v1225 = vadd.f32 %v1203, %v50
    %v1226 = vadd.f32 %v1205, %v50
    %v1227 = vadd.f32 %v1209, %v55
    %v1228 = vadd.f32 %v1211, %v55
    %v1229 = vadd.f32 %v1215, %v60
    %v1230 = vadd.f32 %v1217, %v60
    %v1231 = vadd.f32 %v1221, %v65
    %v1232 = vadd.f32 %v1223, %v65
    %v1233 = vtanh.pop %v1225
    %v1234 = vtanh.pop %v1226
    %v1235 = vtanh.pop %v1227
    %v1236 = vtanh.pop %v1228
    %v1237 = vtanh.pop %v1229
    %v1238 = vtanh.pop %v1230
    %v1239 = vtanh.pop %v1231
    %v1240 = vtanh.pop %v1232
    %1241 = vmatprep.subr.mxu0 0.0
    %1242 = vmatpush1.msra.mxu0 0.0
    %1243 = vmatprep.subr.mxu0 0.0
    %1244 = vmatpush1.msra.mxu0 0.0
    %1245 = vmatprep.subr.mxu0 0.0
    %1246 = vmatpush1.msra.mxu0 0.0
    %1247 = vmatprep.subr.mxu0 0.0
    %1248 = vmatpush1.msra.mxu0 0.0
    %1249 = vmatprep.subr.mxu0 0.0
    %1250 = vmatpush1.msra.mxu0 0.0
    %1251 = vmatprep.subr.mxu0 0.0
    %1252 = vmatpush1.msra.mxu0 0.0
    %1253 = vmatprep.subr.mxu0 0.0
    %1254 = vmatpush1.msra.mxu0 0.0
    %1255 = vmatprep.subr.mxu0 0.0
    %1256 = vmatpush1.msra.mxu0 0.0
    %1257 = vmatprep.subr.mxu0 0.0
    %1258 = vmatpush1.msra.mxu0 0.0
    %1259 = vmatprep.subr.mxu0 0.0
    %1260 = vmatpush1.msra.mxu0 0.0
    %1261 = vmatprep.subr.mxu0 0.0
    %1262 = vmatpush1.msra.mxu0 0.0
    %1263 = vmatprep.subr.mxu0 0.0
    %1264 = vmatpush1.msra.mxu0 0.0
    %1265 = vmatprep.subr.mxu0 %v1240
    %1266 = vmatpush1.msra.mxu0 %v1239
    %1267 = vmatprep.subr.mxu0 %v1238
    %1268 = vmatpush1.msra.mxu0 %v1237
    %1269 = vmatprep.subr.mxu0 %v1236
    %1270 = vmatpush1.msra.mxu0 %v1235
    %1271 = vmatprep.subr.mxu0 %v1234
    %1272 = vmatpush1.msra.mxu0 %v1233
    %1273 = vmatprep.subr.mxu0 0.0
    %1274 = vmatpush2.msra.mxu0 0.0
    %1275 = vmatprep.subr.mxu0 0.0
    %1276 = vmatpush2.msra.mxu0 0.0
    %1277 = vmatprep.subr.mxu0 0.0
    %1278 = vmatpush2.msra.mxu0 0.0
    %1279 = vmatprep.subr.mxu0 0.0
    %1280 = vmatpush2.msra.mxu0 0.0
    %1281 = vmatprep.subr.mxu0 0.0
    %1282 = vmatpush2.msra.mxu0 0.0
    %1283 = vmatprep.subr.mxu0 0.0
    %1284 = vmatpush2.msra.mxu0 0.0
    %1285 = vmatprep.subr.mxu0 0.0
    %1286 = vmatpush2.msra.mxu0 0.0
    %1287 = vmatprep.subr.mxu0 0.0
    %1288 = vmatpush2.msra.mxu0 0.0
    %1289 = vmatprep.subr.mxu0 0.0
    %1290 = vmatpush2.msra.mxu0 0.0
    %1291 = vmatprep.subr.mxu0 0.0
    %1292 = vmatpush2.msra.mxu0 0.0
    %1293 = vmatprep.subr.mxu0 0.0
    %1294 = vmatpush2.msra.mxu0 0.0
    %1295 = vmatprep.subr.mxu0 0.0
    %1296 = vmatpush2.msra.mxu0 0.0
    %1297 = vmatprep.subr.mxu0 0.0
    %1298 = vmatpush2.msra.mxu0 0.0
    %1299 = vmatprep.subr.mxu0 0.0
    %1300 = vmatpush2.msra.mxu0 0.0
    %1301 = vmatprep.subr.mxu0 0.0
    %1302 = vmatpush2.msra.mxu0 0.0
    %1303 = vmatprep.subr.mxu0 0.0
    %1304 = vmatpush2.msra.mxu0 0.0
    %1305 = vmatprep.mubr.f32.mxu0 0.0
    %1306 = vmatmul.mubr.f32.gmra.mxu0 %v331
    %v1307 = vpop.f32.mrf.mxu0
    %v1308 = vadd.f32 %v73, %v1307
    %v1309 = vpop.f32.mrf.mxu0
    %v1310 = vadd.f32 %v73, %v1309
    %1311 = vmatprep.mubr.f32.mxu0 0.0
    %1312 = vmatmul.mubr.f32.gmra.mxu0 %v334
    %v1313 = vpop.f32.mrf.mxu0
    %v1314 = vadd.f32 %v78, %v1313
    %v1315 = vpop.f32.mrf.mxu0
    %v1316 = vadd.f32 %v78, %v1315
    %1317 = vmatprep.mubr.f32.mxu0 0.0
    %1318 = vmatmul.mubr.f32.gmra.mxu0 %v337
    %v1319 = vpop.f32.mrf.mxu0
    %v1320 = vadd.f32 %v83, %v1319
    %v1321 = vpop.f32.mrf.mxu0
    %v1322 = vadd.f32 %v83, %v1321
    %1323 = vdwg.mxu0
    %v1324 = vmul.f32 %v1320, %v1037
    %v1325 = vmul.f32 %v1322, %v1038
    %v1326 = vsub.f32 %v1314, %v1324
    %v1327 = vsub.f32 %v1316, %v1325
    %v1328 = vadd.f32 %v1308, %v89
    %v1329 = vadd.f32 %v1310, %v89
    %v1330 = vrcp.pop %v1328
    %v1331 = vrcp.pop %v1329
    %v1332 = vmul.f32 %v1326, %v1330
    %v1333 = vmul.f32 %v1327, %v1331
    %s1334 = scalar_lea.vmem %s8, 48
    %1335 = vst [vmem:[%s1334] sm:$0x3f] %v1332
    %1336 = vst [vmem:[%s1334 + $0x8] sm:$0x3f] %v1333
    %s1337 = scalar_lea.vmem %s0, 128
    %v1338 = vld [vmem:[%s1337] sm:$0xff]
    %v1339 = vld [vmem:[%s1337 + $0x8] sm:$0xff]
    %v1340 = vld [vmem:[%s1337 + $0x10] sm:$0x3]
    %v1341 = vld [vmem:[%s1337 + $0x18] sm:$0x3]
    %1342 = vmatprep.subr.mxu0 0.0
    %1343 = vmatpush1.msra.mxu0 0.0
    %1344 = vmatprep.subr.mxu0 0.0
    %1345 = vmatpush1.msra.mxu0 0.0
    %1346 = vmatprep.subr.mxu0 0.0
    %1347 = vmatpush1.msra.mxu0 0.0
    %1348 = vmatprep.subr.mxu0 0.0
    %1349 = vmatpush1.msra.mxu0 0.0
    %1350 = vmatprep.subr.mxu0 0.0
    %1351 = vmatpush1.msra.mxu0 0.0
    %1352 = vmatprep.subr.mxu0 0.0
    %1353 = vmatpush1.msra.mxu0 0.0
    %1354 = vmatprep.subr.mxu0 0.0
    %1355 = vmatpush1.msra.mxu0 0.0
    %1356 = vmatprep.subr.mxu0 0.0
    %1357 = vmatpush1.msra.mxu0 0.0
    %1358 = vmatprep.subr.mxu0 0.0
    %1359 = vmatpush1.msra.mxu0 0.0
    %1360 = vmatprep.subr.mxu0 0.0
    %1361 = vmatpush1.msra.mxu0 0.0
    %1362 = vmatprep.subr.mxu0 0.0
    %1363 = vmatpush1.msra.mxu0 0.0
    %1364 = vmatprep.subr.mxu0 0.0
    %1365 = vmatpush1.msra.mxu0 0.0
    %1366 = vmatprep.subr.mxu0 %v1240
    %1367 = vmatpush1.msra.mxu0 %v1239
    %1368 = vmatprep.subr.mxu0 %v1238
    %1369 = vmatpush1.msra.mxu0 %v1237
    %1370 = vmatprep.subr.mxu0 %v1236
    %1371 = vmatpush1.msra.mxu0 %v1235
    %1372 = vmatprep.subr.mxu0 %v1234
    %1373 = vmatpush1.msra.mxu0 %v1233
    %1374 = vmatprep.subr.mxu0 0.0
    %1375 = vmatpush2.msra.mxu0 0.0
    %1376 = vmatprep.subr.mxu0 0.0
    %1377 = vmatpush2.msra.mxu0 0.0
    %1378 = vmatprep.subr.mxu0 0.0
    %1379 = vmatpush2.msra.mxu0 0.0
    %1380 = vmatprep.subr.mxu0 0.0
    %1381 = vmatpush2.msra.mxu0 0.0
    %1382 = vmatprep.subr.mxu0 0.0
    %1383 = vmatpush2.msra.mxu0 0.0
    %1384 = vmatprep.subr.mxu0 0.0
    %1385 = vmatpush2.msra.mxu0 0.0
    %1386 = vmatprep.subr.mxu0 0.0
    %1387 = vmatpush2.msra.mxu0 0.0
    %1388 = vmatprep.subr.mxu0 0.0
    %1389 = vmatpush2.msra.mxu0 0.0
    %1390 = vmatprep.subr.mxu0 0.0
    %1391 = vmatpush2.msra.mxu0 0.0
    %1392 = vmatprep.subr.mxu0 0.0
    %1393 = vmatpush2.msra.mxu0 0.0
    %1394 = vmatprep.subr.mxu0 0.0
    %1395 = vmatpush2.msra.mxu0 0.0
    %1396 = vmatprep.subr.mxu0 0.0
    %1397 = vmatpush2.msra.mxu0 0.0
    %1398 = vmatprep.subr.mxu0 0.0
    %1399 = vmatpush2.msra.mxu0 0.0
    %1400 = vmatprep.subr.mxu0 0.0
    %1401 = vmatpush2.msra.mxu0 0.0
    %1402 = vmatprep.subr.mxu0 0.0
    %1403 = vmatpush2.msra.mxu0 0.0
    %1404 = vmatprep.subr.mxu0 0.0
    %1405 = vmatpush2.msra.mxu0 0.0
    %1406 = vmatprep.mubr.f32.mxu0 0.0
    %1407 = vmatmul.mubr.f32.gmra.mxu0 %v105
    %v1408 = vpop.f32.mrf.mxu0
    %v1409 = vadd.f32 0.0, %v1408
    %v1410 = vpop.f32.mrf.mxu0
    %v1411 = vadd.f32 0.0, %v1410
    %1412 = vmatprep.mubr.f32.mxu0 0.0
    %1413 = vmatmul.mubr.f32.gmra.mxu0 %v108
    %v1414 = vpop.f32.mrf.mxu0
    %v1415 = vadd.f32 0.0, %v1414
    %v1416 = vpop.f32.mrf.mxu0
    %v1417 = vadd.f32 0.0, %v1416
    %1418 = vmatprep.mubr.f32.mxu0 0.0
    %1419 = vmatmul.mubr.f32.gmra.mxu0 %v111
    %v1420 = vpop.f32.mrf.mxu0
    %v1421 = vadd.f32 0.0, %v1420
    %v1422 = vpop.f32.mrf.mxu0
    %v1423 = vadd.f32 0.0, %v1422
    %1424 = vmatprep.mubr.f32.mxu0 0.0
    %1425 = vmatmul.mubr.f32.gmra.mxu0 %v114
    %v1426 = vpop.f32.mrf.mxu0
    %v1427 = vadd.f32 0.0, %v1426
    %v1428 = vpop.f32.mrf.mxu0
    %v1429 = vadd.f32 0.0, %v1428
    %1430 = vdwg.mxu0
    %v1432 = vsel %vm218, %v1340, 0
    %v1435 = vsel %vm218, %v1341, 0
    %1437 = vmatprep.subr.mxu0 0.0
    %1438 = vmatpush1.msra.mxu0 0.0
    %1439 = vmatprep.subr.mxu0 0.0
    %1440 = vmatpush1.msra.mxu0 0.0
    %1441 = vmatprep.subr.mxu0 0.0
    %1442 = vmatpush1.msra.mxu0 0.0
    %1443 = vmatprep.subr.mxu0 0.0
    %1444 = vmatpush1.msra.mxu0 0.0
    %1445 = vmatprep.subr.mxu0 0.0
    %1446 = vmatpush1.msra.mxu0 0.0
    %1447 = vmatprep.subr.mxu0 0.0
    %1448 = vmatpush1.msra.mxu0 0.0
    %1449 = vmatprep.subr.mxu0 0.0
    %1450 = vmatpush1.msra.mxu0 0.0
    %1451 = vmatprep.subr.mxu0 0.0
    %1452 = vmatpush1.msra.mxu0 0.0
    %1453 = vmatprep.subr.mxu0 0.0
    %1454 = vmatpush1.msra.mxu0 0.0
    %1455 = vmatprep.subr.mxu0 0.0
    %1456 = vmatpush1.msra.mxu0 0.0
    %1457 = vmatprep.subr.mxu0 0.0
    %1458 = vmatpush1.msra.mxu0 0.0
    %1459 = vmatprep.subr.mxu0 0.0
    %1460 = vmatpush1.msra.mxu0 0.0
    %1461 = vmatprep.subr.mxu0 0.0
    %1462 = vmatpush1.msra.mxu0 0.0
    %1463 = vmatprep.subr.mxu0 0.0
    %1464 = vmatpush1.msra.mxu0 0.0
    %1465 = vmatprep.subr.mxu0 %v1435
    %1466 = vmatpush1.msra.mxu0 %v1432
    %1467 = vmatprep.subr.mxu0 %v1339
    %1468 = vmatpush1.msra.mxu0 %v1338
    %1469 = vmatprep.subr.mxu0 0.0
    %1470 = vmatpush2.msra.mxu0 0.0
    %1471 = vmatprep.subr.mxu0 0.0
    %1472 = vmatpush2.msra.mxu0 0.0
    %1473 = vmatprep.subr.mxu0 0.0
    %1474 = vmatpush2.msra.mxu0 0.0
    %1475 = vmatprep.subr.mxu0 0.0
    %1476 = vmatpush2.msra.mxu0 0.0
    %1477 = vmatprep.subr.mxu0 0.0
    %1478 = vmatpush2.msra.mxu0 0.0
    %1479 = vmatprep.subr.mxu0 0.0
    %1480 = vmatpush2.msra.mxu0 0.0
    %1481 = vmatprep.subr.mxu0 0.0
    %1482 = vmatpush2.msra.mxu0 0.0
    %1483 = vmatprep.subr.mxu0 0.0
    %1484 = vmatpush2.msra.mxu0 0.0
    %1485 = vmatprep.subr.mxu0 0.0
    %1486 = vmatpush2.msra.mxu0 0.0
    %1487 = vmatprep.subr.mxu0 0.0
    %1488 = vmatpush2.msra.mxu0 0.0
    %1489 = vmatprep.subr.mxu0 0.0
    %1490 = vmatpush2.msra.mxu0 0.0
    %1491 = vmatprep.subr.mxu0 0.0
    %1492 = vmatpush2.msra.mxu0 0.0
    %1493 = vmatprep.subr.mxu0 0.0
    %1494 = vmatpush2.msra.mxu0 0.0
    %1495 = vmatprep.subr.mxu0 0.0
    %1496 = vmatpush2.msra.mxu0 0.0
    %1497 = vmatprep.subr.mxu0 0.0
    %1498 = vmatpush2.msra.mxu0 0.0
    %1499 = vmatprep.subr.mxu0 0.0
    %1500 = vmatpush2.msra.mxu0 0.0
    %1501 = vmatprep.mubr.f32.mxu0 0.0
    %1502 = vmatmul.mubr.f32.gmra.mxu0 %v207
    %v1503 = vpop.f32.mrf.mxu0
    %v1504 = vadd.f32 %v1409, %v1503
    %v1505 = vpop.f32.mrf.mxu0
    %v1506 = vadd.f32 %v1411, %v1505
    %1507 = vmatprep.mubr.f32.mxu0 0.0
    %1508 = vmatmul.mubr.f32.gmra.mxu0 %v210
    %v1509 = vpop.f32.mrf.mxu0
    %v1510 = vadd.f32 %v1415, %v1509
    %v1511 = vpop.f32.mrf.mxu0
    %v1512 = vadd.f32 %v1417, %v1511
    %1513 = vmatprep.mubr.f32.mxu0 0.0
    %1514 = vmatmul.mubr.f32.gmra.mxu0 %v213
    %v1515 = vpop.f32.mrf.mxu0
    %v1516 = vadd.f32 %v1421, %v1515
    %v1517 = vpop.f32.mrf.mxu0
    %v1518 = vadd.f32 %v1423, %v1517
    %1519 = vmatprep.mubr.f32.mxu0 0.0
    %1520 = vmatmul.mubr.f32.gmra.mxu0 %v216
    %v1521 = vpop.f32.mrf.mxu0
    %v1522 = vadd.f32 %v1427, %v1521
    %v1523 = vpop.f32.mrf.mxu0
    %v1524 = vadd.f32 %v1429, %v1523
    %1525 = vdwg.mxu0
    %v1526 = vadd.f32 %v1504, %v50
    %v1527 = vadd.f32 %v1506, %v50
    %v1528 = vadd.f32 %v1510, %v55
    %v1529 = vadd.f32 %v1512, %v55
    %v1530 = vadd.f32 %v1516, %v60
    %v1531 = vadd.f32 %v1518, %v60
    %v1532 = vadd.f32 %v1522, %v65
    %v1533 = vadd.f32 %v1524, %v65
    %v1534 = vtanh.pop %v1526
    %v1535 = vtanh.pop %v1527
    %v1536 = vtanh.pop %v1528
    %v1537 = vtanh.pop %v1529
    %v1538 = vtanh.pop %v1530
    %v1539 = vtanh.pop %v1531
    %v1540 = vtanh.pop %v1532
    %v1541 = vtanh.pop %v1533
    %1542 = vmatprep.subr.mxu0 0.0
    %1543 = vmatpush1.msra.mxu0 0.0
    %1544 = vmatprep.subr.mxu0 0.0
    %1545 = vmatpush1.msra.mxu0 0.0
    %1546 = vmatprep.subr.mxu0 0.0
    %1547 = vmatpush1.msra.mxu0 0.0
    %1548 = vmatprep.subr.mxu0 0.0
    %1549 = vmatpush1.msra.mxu0 0.0
    %1550 = vmatprep.subr.mxu0 0.0
    %1551 = vmatpush1.msra.mxu0 0.0
    %1552 = vmatprep.subr.mxu0 0.0
    %1553 = vmatpush1.msra.mxu0 0.0
    %1554 = vmatprep.subr.mxu0 0.0
    %1555 = vmatpush1.msra.mxu0 0.0
    %1556 = vmatprep.subr.mxu0 0.0
    %1557 = vmatpush1.msra.mxu0 0.0
    %1558 = vmatprep.subr.mxu0 0.0
    %1559 = vmatpush1.msra.mxu0 0.0
    %1560 = vmatprep.subr.mxu0 0.0
    %1561 = vmatpush1.msra.mxu0 0.0
    %1562 = vmatprep.subr.mxu0 0.0
    %1563 = vmatpush1.msra.mxu0 0.0
    %1564 = vmatprep.subr.mxu0 0.0
    %1565 = vmatpush1.msra.mxu0 0.0
    %1566 = vmatprep.subr.mxu0 %v1541
    %1567 = vmatpush1.msra.mxu0 %v1540
    %1568 = vmatprep.subr.mxu0 %v1539
    %1569 = vmatpush1.msra.mxu0 %v1538
    %1570 = vmatprep.subr.mxu0 %v1537
    %1571 = vmatpush1.msra.mxu0 %v1536
    %1572 = vmatprep.subr.mxu0 %v1535
    %1573 = vmatpush1.msra.mxu0 %v1534
    %1574 = vmatprep.subr.mxu0 0.0
    %1575 = vmatpush2.msra.mxu0 0.0
    %1576 = vmatprep.subr.mxu0 0.0
    %1577 = vmatpush2.msra.mxu0 0.0
    %1578 = vmatprep.subr.mxu0 0.0
    %1579 = vmatpush2.msra.mxu0 0.0
    %1580 = vmatprep.subr.mxu0 0.0
    %1581 = vmatpush2.msra.mxu0 0.0
    %1582 = vmatprep.subr.mxu0 0.0
    %1583 = vmatpush2.msra.mxu0 0.0
    %1584 = vmatprep.subr.mxu0 0.0
    %1585 = vmatpush2.msra.mxu0 0.0
    %1586 = vmatprep.subr.mxu0 0.0
    %1587 = vmatpush2.msra.mxu0 0.0
    %1588 = vmatprep.subr.mxu0 0.0
    %1589 = vmatpush2.msra.mxu0 0.0
    %1590 = vmatprep.subr.mxu0 0.0
    %1591 = vmatpush2.msra.mxu0 0.0
    %1592 = vmatprep.subr.mxu0 0.0
    %1593 = vmatpush2.msra.mxu0 0.0
    %1594 = vmatprep.subr.mxu0 0.0
    %1595 = vmatpush2.msra.mxu0 0.0
    %1596 = vmatprep.subr.mxu0 0.0
    %1597 = vmatpush2.msra.mxu0 0.0
    %1598 = vmatprep.subr.mxu0 0.0
    %1599 = vmatpush2.msra.mxu0 0.0
    %1600 = vmatprep.subr.mxu0 0.0
    %1601 = vmatpush2.msra.mxu0 0.0
    %1602 = vmatprep.subr.mxu0 0.0
    %1603 = vmatpush2.msra.mxu0 0.0
    %1604 = vmatprep.subr.mxu0 0.0
    %1605 = vmatpush2.msra.mxu0 0.0
    %1606 = vmatprep.mubr.f32.mxu0 0.0
    %1607 = vmatmul.mubr.f32.gmra.mxu0 %v331
    %v1608 = vpop.f32.mrf.mxu0
    %v1609 = vadd.f32 %v73, %v1608
    %v1610 = vpop.f32.mrf.mxu0
    %v1611 = vadd.f32 %v73, %v1610
    %1612 = vmatprep.mubr.f32.mxu0 0.0
    %1613 = vmatmul.mubr.f32.gmra.mxu0 %v334
    %v1614 = vpop.f32.mrf.mxu0
    %v1615 = vadd.f32 %v78, %v1614
    %v1616 = vpop.f32.mrf.mxu0
    %v1617 = vadd.f32 %v78, %v1616
    %1618 = vmatprep.mubr.f32.mxu0 0.0
    %1619 = vmatmul.mubr.f32.gmra.mxu0 %v337
    %v1620 = vpop.f32.mrf.mxu0
    %v1621 = vadd.f32 %v83, %v1620
    %v1622 = vpop.f32.mrf.mxu0
    %v1623 = vadd.f32 %v83, %v1622
    %1624 = vdwg.mxu0
    %v1625 = vmul.f32 %v1621, %v1338
    %v1626 = vmul.f32 %v1623, %v1339
    %v1627 = vsub.f32 %v1615, %v1625
    %v1628 = vsub.f32 %v1617, %v1626
    %v1629 = vadd.f32 %v1609, %v89
    %v1630 = vadd.f32 %v1611, %v89
    %v1631 = vrcp.pop %v1629
    %v1632 = vrcp.pop %v1630
    %v1633 = vmul.f32 %v1627, %v1631
    %v1634 = vmul.f32 %v1628, %v1632
    %s1635 = scalar_lea.vmem %s8, 64
    %1636 = vst [vmem:[%s1635] sm:$0x3f] %v1633
    %1637 = vst [vmem:[%s1635 + $0x8] sm:$0x3f] %v1634
    %s1638 = scalar_lea.vmem %s0, 160
    %v1639 = vld [vmem:[%s1638] sm:$0xff]
    %v1640 = vld [vmem:[%s1638 + $0x8] sm:$0xff]
    %v1641 = vld [vmem:[%s1638 + $0x10] sm:$0x3]
    %v1642 = vld [vmem:[%s1638 + $0x18] sm:$0x3]
    %1643 = vmatprep.subr.mxu0 0.0
    %1644 = vmatpush1.msra.mxu0 0.0
    %1645 = vmatprep.subr.mxu0 0.0
    %1646 = vmatpush1.msra.mxu0 0.0
    %1647 = vmatprep.subr.mxu0 0.0
    %1648 = vmatpush1.msra.mxu0 0.0
    %1649 = vmatprep.subr.mxu0 0.0
    %1650 = vmatpush1.msra.mxu0 0.0
    %1651 = vmatprep.subr.mxu0 0.0
    %1652 = vmatpush1.msra.mxu0 0.0
    %1653 = vmatprep.subr.mxu0 0.0
    %1654 = vmatpush1.msra.mxu0 0.0
    %1655 = vmatprep.subr.mxu0 0.0
    %1656 = vmatpush1.msra.mxu0 0.0
    %1657 = vmatprep.subr.mxu0 0.0
    %1658 = vmatpush1.msra.mxu0 0.0
    %1659 = vmatprep.subr.mxu0 0.0
    %1660 = vmatpush1.msra.mxu0 0.0
    %1661 = vmatprep.subr.mxu0 0.0
    %1662 = vmatpush1.msra.mxu0 0.0
    %1663 = vmatprep.subr.mxu0 0.0
    %1664 = vmatpush1.msra.mxu0 0.0
    %1665 = vmatprep.subr.mxu0 0.0
    %1666 = vmatpush1.msra.mxu0 0.0
    %1667 = vmatprep.subr.mxu0 %v1541
    %1668 = vmatpush1.msra.mxu0 %v1540
    %1669 = vmatprep.subr.mxu0 %v1539
    %1670 = vmatpush1.msra.mxu0 %v1538
    %1671 = vmatprep.subr.mxu0 %v1537
    %1672 = vmatpush1.msra.mxu0 %v1536
    %1673 = vmatprep.subr.mxu0 %v1535
    %1674 = vmatpush1.msra.mxu0 %v1534
    %1675 = vmatprep.subr.mxu0 0.0
    %1676 = vmatpush2.msra.mxu0 0.0
    %1677 = vmatprep.subr.mxu0 0.0
    %1678 = vmatpush2.msra.mxu0 0.0
    %1679 = vmatprep.subr.mxu0 0.0
    %1680 = vmatpush2.msra.mxu0 0.0
    %1681 = vmatprep.subr.mxu0 0.0
    %1682 = vmatpush2.msra.mxu0 0.0
    %1683 = vmatprep.subr.mxu0 0.0
    %1684 = vmatpush2.msra.mxu0 0.0
    %1685 = vmatprep.subr.mxu0 0.0
    %1686 = vmatpush2.msra.mxu0 0.0
    %1687 = vmatprep.subr.mxu0 0.0
    %1688 = vmatpush2.msra.mxu0 0.0
    %1689 = vmatprep.subr.mxu0 0.0
    %1690 = vmatpush2.msra.mxu0 0.0
    %1691 = vmatprep.subr.mxu0 0.0
    %1692 = vmatpush2.msra.mxu0 0.0
    %1693 = vmatprep.subr.mxu0 0.0
    %1694 = vmatpush2.msra.mxu0 0.0
    %1695 = vmatprep.subr.mxu0 0.0
    %1696 = vmatpush2.msra.mxu0 0.0
    %1697 = vmatprep.subr.mxu0 0.0
    %1698 = vmatpush2.msra.mxu0 0.0
    %1699 = vmatprep.subr.mxu0 0.0
    %1700 = vmatpush2.msra.mxu0 0.0
    %1701 = vmatprep.subr.mxu0 0.0
    %1702 = vmatpush2.msra.mxu0 0.0
    %1703 = vmatprep.subr.mxu0 0.0
    %1704 = vmatpush2.msra.mxu0 0.0
    %1705 = vmatprep.subr.mxu0 0.0
    %1706 = vmatpush2.msra.mxu0 0.0
    %1707 = vmatprep.mubr.f32.mxu0 0.0
    %1708 = vmatmul.mubr.f32.gmra.mxu0 %v105
    %v1709 = vpop.f32.mrf.mxu0
    %v1710 = vadd.f32 0.0, %v1709
    %v1711 = vpop.f32.mrf.mxu0
    %v1712 = vadd.f32 0.0, %v1711
    %1713 = vmatprep.mubr.f32.mxu0 0.0
    %1714 = vmatmul.mubr.f32.gmra.mxu0 %v108
    %v1715 = vpop.f32.mrf.mxu0
    %v1716 = vadd.f32 0.0, %v1715
    %v1717 = vpop.f32.mrf.mxu0
    %v1718 = vadd.f32 0.0, %v1717
    %1719 = vmatprep.mubr.f32.mxu0 0.0
    %1720 = vmatmul.mubr.f32.gmra.mxu0 %v111
    %v1721 = vpop.f32.mrf.mxu0
    %v1722 = vadd.f32 0.0, %v1721
    %v1723 = vpop.f32.mrf.mxu0
    %v1724 = vadd.f32 0.0, %v1723
    %1725 = vmatprep.mubr.f32.mxu0 0.0
    %1726 = vmatmul.mubr.f32.gmra.mxu0 %v114
    %v1727 = vpop.f32.mrf.mxu0
    %v1728 = vadd.f32 0.0, %v1727
    %v1729 = vpop.f32.mrf.mxu0
    %v1730 = vadd.f32 0.0, %v1729
    %1731 = vdwg.mxu0
    %v1733 = vsel %vm218, %v1641, 0
    %v1736 = vsel %vm218, %v1642, 0
    %1738 = vmatprep.subr.mxu0 0.0
    %1739 = vmatpush1.msra.mxu0 0.0
    %1740 = vmatprep.subr.mxu0 0.0
    %1741 = vmatpush1.msra.mxu0 0.0
    %1742 = vmatprep.subr.mxu0 0.0
    %1743 = vmatpush1.msra.mxu0 0.0
    %1744 = vmatprep.subr.mxu0 0.0
    %1745 = vmatpush1.msra.mxu0 0.0
    %1746 = vmatprep.subr.mxu0 0.0
    %1747 = vmatpush1.msra.mxu0 0.0
    %1748 = vmatprep.subr.mxu0 0.0
    %1749 = vmatpush1.msra.mxu0 0.0
    %1750 = vmatprep.subr.mxu0 0.0
    %1751 = vmatpush1.msra.mxu0 0.0
    %1752 = vmatprep.subr.mxu0 0.0
    %1753 = vmatpush1.msra.mxu0 0.0
    %1754 = vmatprep.subr.mxu0 0.0
    %1755 = vmatpush1.msra.mxu0 0.0
    %1756 = vmatprep.subr.mxu0 0.0
    %1757 = vmatpush1.msra.mxu0 0.0
    %1758 = vmatprep.subr.mxu0 0.0
    %1759 = vmatpush1.msra.mxu0 0.0
    %1760 = vmatprep.subr.mxu0 0.0
    %1761 = vmatpush1.msra.mxu0 0.0
    %1762 = vmatprep.subr.mxu0 0.0
    %1763 = vmatpush1.msra.mxu0 0.0
    %1764 = vmatprep.subr.mxu0 0.0
    %1765 = vmatpush1.msra.mxu0 0.0
    %1766 = vmatprep.subr.mxu0 %v1736
    %1767 = vmatpush1.msra.mxu0 %v1733
    %1768 = vmatprep.subr.mxu0 %v1640
    %1769 = vmatpush1.msra.mxu0 %v1639
    %1770 = vmatprep.subr.mxu0 0.0
    %1771 = vmatpush2.msra.mxu0 0.0
    %1772 = vmatprep.subr.mxu0 0.0
    %1773 = vmatpush2.msra.mxu0 0.0
    %1774 = vmatprep.subr.mxu0 0.0
    %1775 = vmatpush2.msra.mxu0 0.0
    %1776 = vmatprep.subr.mxu0 0.0
    %1777 = vmatpush2.msra.mxu0 0.0
    %1778 = vmatprep.subr.mxu0 0.0
    %1779 = vmatpush2.msra.mxu0 0.0
    %1780 = vmatprep.subr.mxu0 0.0
    %1781 = vmatpush2.msra.mxu0 0.0
    %1782 = vmatprep.subr.mxu0 0.0
    %1783 = vmatpush2.msra.mxu0 0.0
    %1784 = vmatprep.subr.mxu0 0.0
    %1785 = vmatpush2.msra.mxu0 0.0
    %1786 = vmatprep.subr.mxu0 0.0
    %1787 = vmatpush2.msra.mxu0 0.0
    %1788 = vmatprep.subr.mxu0 0.0
    %1789 = vmatpush2.msra.mxu0 0.0
    %1790 = vmatprep.subr.mxu0 0.0
    %1791 = vmatpush2.msra.mxu0 0.0
    %1792 = vmatprep.subr.mxu0 0.0
    %1793 = vmatpush2.msra.mxu0 0.0
    %1794 = vmatprep.subr.mxu0 0.0
    %1795 = vmatpush2.msra.mxu0 0.0
    %1796 = vmatprep.subr.mxu0 0.0
    %1797 = vmatpush2.msra.mxu0 0.0
    %1798 = vmatprep.subr.mxu0 0.0
    %1799 = vmatpush2.msra.mxu0 0.0
    %1800 = vmatprep.subr.mxu0 0.0
    %1801 = vmatpush2.msra.mxu0 0.0
    %1802 = vmatprep.mubr.f32.mxu0 0.0
    %1803 = vmatmul.mubr.f32.gmra.mxu0 %v207
    %v1804 = vpop.f32.mrf.mxu0
    %v1805 = vadd.f32 %v1710, %v1804
    %v1806 = vpop.f32.mrf.mxu0
    %v1807 = vadd.f32 %v1712, %v1806
    %1808 = vmatprep.mubr.f32.mxu0 0.0
    %1809 = vmatmul.mubr.f32.gmra.mxu0 %v210
    %v1810 = vpop.f32.mrf.mxu0
    %v1811 = vadd.f32 %v1716, %v1810
    %v1812 = vpop.f32.mrf.mxu0
    %v1813 = vadd.f32 %v1718, %v1812
    %1814 = vmatprep.mubr.f32.mxu0 0.0
    %1815 = vmatmul.mubr.f32.gmra.mxu0 %v213
    %v1816 = vpop.f32.mrf.mxu0
    %v1817 = vadd.f32 %v1722, %v1816
    %v1818 = vpop.f32.mrf.mxu0
    %v1819 = vadd.f32 %v1724, %v1818
    %1820 = vmatprep.mubr.f32.mxu0 0.0
    %1821 = vmatmul.mubr.f32.gmra.mxu0 %v216
    %v1822 = vpop.f32.mrf.mxu0
    %v1823 = vadd.f32 %v1728, %v1822
    %v1824 = vpop.f32.mrf.mxu0
    %v1825 = vadd.f32 %v1730, %v1824
    %1826 = vdwg.mxu0
    %v1827 = vadd.f32 %v1805, %v50
    %v1828 = vadd.f32 %v1807, %v50
    %v1829 = vadd.f32 %v1811, %v55
    %v1830 = vadd.f32 %v1813, %v55
    %v1831 = vadd.f32 %v1817, %v60
    %v1832 = vadd.f32 %v1819, %v60
    %v1833 = vadd.f32 %v1823, %v65
    %v1834 = vadd.f32 %v1825, %v65
    %v1835 = vtanh.pop %v1827
    %v1836 = vtanh.pop %v1828
    %v1837 = vtanh.pop %v1829
    %v1838 = vtanh.pop %v1830
    %v1839 = vtanh.pop %v1831
    %v1840 = vtanh.pop %v1832
    %v1841 = vtanh.pop %v1833
    %v1842 = vtanh.pop %v1834
    %1843 = vmatprep.subr.mxu0 0.0
    %1844 = vmatpush1.msra.mxu0 0.0
    %1845 = vmatprep.subr.mxu0 0.0
    %1846 = vmatpush1.msra.mxu0 0.0
    %1847 = vmatprep.subr.mxu0 0.0
    %1848 = vmatpush1.msra.mxu0 0.0
    %1849 = vmatprep.subr.mxu0 0.0
    %1850 = vmatpush1.msra.mxu0 0.0
    %1851 = vmatprep.subr.mxu0 0.0
    %1852 = vmatpush1.msra.mxu0 0.0
    %1853 = vmatprep.subr.mxu0 0.0
    %1854 = vmatpush1.msra.mxu0 0.0
    %1855 = vmatprep.subr.mxu0 0.0
    %1856 = vmatpush1.msra.mxu0 0.0
    %1857 = vmatprep.subr.mxu0 0.0
    %1858 = vmatpush1.msra.mxu0 0.0
    %1859 = vmatprep.subr.mxu0 0.0
    %1860 = vmatpush1.msra.mxu0 0.0
    %1861 = vmatprep.subr.mxu0 0.0
    %1862 = vmatpush1.msra.mxu0 0.0
    %1863 = vmatprep.subr.mxu0 0.0
    %1864 = vmatpush1.msra.mxu0 0.0
    %1865 = vmatprep.subr.mxu0 0.0
    %1866 = vmatpush1.msra.mxu0 0.0
    %1867 = vmatprep.subr.mxu0 %v1842
    %1868 = vmatpush1.msra.mxu0 %v1841
    %1869 = vmatprep.subr.mxu0 %v1840
    %1870 = vmatpush1.msra.mxu0 %v1839
    %1871 = vmatprep.subr.mxu0 %v1838
    %1872 = vmatpush1.msra.mxu0 %v1837
    %1873 = vmatprep.subr.mxu0 %v1836
    %1874 = vmatpush1.msra.mxu0 %v1835
    %1875 = vmatprep.subr.mxu0 0.0
    %1876 = vmatpush2.msra.mxu0 0.0
    %1877 = vmatprep.subr.mxu0 0.0
    %1878 = vmatpush2.msra.mxu0 0.0
    %1879 = vmatprep.subr.mxu0 0.0
    %1880 = vmatpush2.msra.mxu0 0.0
    %1881 = vmatprep.subr.mxu0 0.0
    %1882 = vmatpush2.msra.mxu0 0.0
    %1883 = vmatprep.subr.mxu0 0.0
    %1884 = vmatpush2.msra.mxu0 0.0
    %1885 = vmatprep.subr.mxu0 0.0
    %1886 = vmatpush2.msra.mxu0 0.0
    %1887 = vmatprep.subr.mxu0 0.0
    %1888 = vmatpush2.msra.mxu0 0.0
    %1889 = vmatprep.subr.mxu0 0.0
    %1890 = vmatpush2.msra.mxu0 0.0
    %1891 = vmatprep.subr.mxu0 0.0
    %1892 = vmatpush2.msra.mxu0 0.0
    %1893 = vmatprep.subr.mxu0 0.0
    %1894 = vmatpush2.msra.mxu0 0.0
    %1895 = vmatprep.subr.mxu0 0.0
    %1896 = vmatpush2.msra.mxu0 0.0
    %1897 = vmatprep.subr.mxu0 0.0
    %1898 = vmatpush2.msra.mxu0 0.0
    %1899 = vmatprep.subr.mxu0 0.0
    %1900 = vmatpush2.msra.mxu0 0.0
    %1901 = vmatprep.subr.mxu0 0.0
    %1902 = vmatpush2.msra.mxu0 0.0
    %1903 = vmatprep.subr.mxu0 0.0
    %1904 = vmatpush2.msra.mxu0 0.0
    %1905 = vmatprep.subr.mxu0 0.0
    %1906 = vmatpush2.msra.mxu0 0.0
    %1907 = vmatprep.mubr.f32.mxu0 0.0
    %1908 = vmatmul.mubr.f32.gmra.mxu0 %v331
    %v1909 = vpop.f32.mrf.mxu0
    %v1910 = vadd.f32 %v73, %v1909
    %v1911 = vpop.f32.mrf.mxu0
    %v1912 = vadd.f32 %v73, %v1911
    %1913 = vmatprep.mubr.f32.mxu0 0.0
    %1914 = vmatmul.mubr.f32.gmra.mxu0 %v334
    %v1915 = vpop.f32.mrf.mxu0
    %v1916 = vadd.f32 %v78, %v1915
    %v1917 = vpop.f32.mrf.mxu0
    %v1918 = vadd.f32 %v78, %v1917
    %1919 = vmatprep.mubr.f32.mxu0 0.0
    %1920 = vmatmul.mubr.f32.gmra.mxu0 %v337
    %v1921 = vpop.f32.mrf.mxu0
    %v1922 = vadd.f32 %v83, %v1921
    %v1923 = vpop.f32.mrf.mxu0
    %v1924 = vadd.f32 %v83, %v1923
    %1925 = vdwg.mxu0
    %v1926 = vmul.f32 %v1922, %v1639
    %v1927 = vmul.f32 %v1924, %v1640
    %v1928 = vsub.f32 %v1916, %v1926
    %v1929 = vsub.f32 %v1918, %v1927
    %v1930 = vadd.f32 %v1910, %v89
    %v1931 = vadd.f32 %v1912, %v89
    %v1932 = vrcp.pop %v1930
    %v1933 = vrcp.pop %v1931
    %v1934 = vmul.f32 %v1928, %v1932
    %v1935 = vmul.f32 %v1929, %v1933
    %s1936 = scalar_lea.vmem %s8, 80
    %1937 = vst [vmem:[%s1936] sm:$0x3f] %v1934
    %1938 = vst [vmem:[%s1936 + $0x8] sm:$0x3f] %v1935
    %s1939 = scalar_lea.vmem %s0, 192
    %v1940 = vld [vmem:[%s1939] sm:$0xff]
    %v1941 = vld [vmem:[%s1939 + $0x8] sm:$0xff]
    %v1942 = vld [vmem:[%s1939 + $0x10] sm:$0x3]
    %v1943 = vld [vmem:[%s1939 + $0x18] sm:$0x3]
    %1944 = vmatprep.subr.mxu0 0.0
    %1945 = vmatpush1.msra.mxu0 0.0
    %1946 = vmatprep.subr.mxu0 0.0
    %1947 = vmatpush1.msra.mxu0 0.0
    %1948 = vmatprep.subr.mxu0 0.0
    %1949 = vmatpush1.msra.mxu0 0.0
    %1950 = vmatprep.subr.mxu0 0.0
    %1951 = vmatpush1.msra.mxu0 0.0
    %1952 = vmatprep.subr.mxu0 0.0
    %1953 = vmatpush1.msra.mxu0 0.0
    %1954 = vmatprep.subr.mxu0 0.0
    %1955 = vmatpush1.msra.mxu0 0.0
    %1956 = vmatprep.subr.mxu0 0.0
    %1957 = vmatpush1.msra.mxu0 0.0
    %1958 = vmatprep.subr.mxu0 0.0
    %1959 = vmatpush1.msra.mxu0 0.0
    %1960 = vmatprep.subr.mxu0 0.0
    %1961 = vmatpush1.msra.mxu0 0.0
    %1962 = vmatprep.subr.mxu0 0.0
    %1963 = vmatpush1.msra.mxu0 0.0
    %1964 = vmatprep.subr.mxu0 0.0
    %1965 = vmatpush1.msra.mxu0 0.0
    %1966 = vmatprep.subr.mxu0 0.0
    %1967 = vmatpush1.msra.mxu0 0.0
    %1968 = vmatprep.subr.mxu0 %v1842
    %1969 = vmatpush1.msra.mxu0 %v1841
    %1970 = vmatprep.subr.mxu0 %v1840
    %1971 = vmatpush1.msra.mxu0 %v1839
    %1972 = vmatprep.subr.mxu0 %v1838
    %1973 = vmatpush1.msra.mxu0 %v1837
    %1974 = vmatprep.subr.mxu0 %v1836
    %1975 = vmatpush1.msra.mxu0 %v1835
    %1976 = vmatprep.subr.mxu0 0.0
    %1977 = vmatpush2.msra.mxu0 0.0
    %1978 = vmatprep.subr.mxu0 0.0
    %1979 = vmatpush2.msra.mxu0 0.0
    %1980 = vmatprep.subr.mxu0 0.0
    %1981 = vmatpush2.msra.mxu0 0.0
    %1982 = vmatprep.subr.mxu0 0.0
    %1983 = vmatpush2.msra.mxu0 0.0
    %1984 = vmatprep.subr.mxu0 0.0
    %1985 = vmatpush2.msra.mxu0 0.0
    %1986 = vmatprep.subr.mxu0 0.0
    %1987 = vmatpush2.msra.mxu0 0.0
    %1988 = vmatprep.subr.mxu0 0.0
    %1989 = vmatpush2.msra.mxu0 0.0
    %1990 = vmatprep.subr.mxu0 0.0
    %1991 = vmatpush2.msra.mxu0 0.0
    %1992 = vmatprep.subr.mxu0 0.0
    %1993 = vmatpush2.msra.mxu0 0.0
    %1994 = vmatprep.subr.mxu0 0.0
    %1995 = vmatpush2.msra.mxu0 0.0
    %1996 = vmatprep.subr.mxu0 0.0
    %1997 = vmatpush2.msra.mxu0 0.0
    %1998 = vmatprep.subr.mxu0 0.0
    %1999 = vmatpush2.msra.mxu0 0.0
    %2000 = vmatprep.subr.mxu0 0.0
    %2001 = vmatpush2.msra.mxu0 0.0
    %2002 = vmatprep.subr.mxu0 0.0
    %2003 = vmatpush2.msra.mxu0 0.0
    %2004 = vmatprep.subr.mxu0 0.0
    %2005 = vmatpush2.msra.mxu0 0.0
    %2006 = vmatprep.subr.mxu0 0.0
    %2007 = vmatpush2.msra.mxu0 0.0
    %2008 = vmatprep.mubr.f32.mxu0 0.0
    %2009 = vmatmul.mubr.f32.gmra.mxu0 %v105
    %v2010 = vpop.f32.mrf.mxu0
    %v2011 = vadd.f32 0.0, %v2010
    %v2012 = vpop.f32.mrf.mxu0
    %v2013 = vadd.f32 0.0, %v2012
    %2014 = vmatprep.mubr.f32.mxu0 0.0
    %2015 = vmatmul.mubr.f32.gmra.mxu0 %v108
    %v2016 = vpop.f32.mrf.mxu0
    %v2017 = vadd.f32 0.0, %v2016
    %v2018 = vpop.f32.mrf.mxu0
    %v2019 = vadd.f32 0.0, %v2018
    %2020 = vmatprep.mubr.f32.mxu0 0.0
    %2021 = vmatmul.mubr.f32.gmra.mxu0 %v111
    %v2022 = vpop.f32.mrf.mxu0
    %v2023 = vadd.f32 0.0, %v2022
    %v2024 = vpop.f32.mrf.mxu0
    %v2025 = vadd.f32 0.0, %v2024
    %2026 = vmatprep.mubr.f32.mxu0 0.0
    %2027 = vmatmul.mubr.f32.gmra.mxu0 %v114
    %v2028 = vpop.f32.mrf.mxu0
    %v2029 = vadd.f32 0.0, %v2028
    %v2030 = vpop.f32.mrf.mxu0
    %v2031 = vadd.f32 0.0, %v2030
    %2032 = vdwg.mxu0
    %v2034 = vsel %vm218, %v1942, 0
    %v2037 = vsel %vm218, %v1943, 0
    %2039 = vmatprep.subr.mxu0 0.0
    %2040 = vmatpush1.msra.mxu0 0.0
    %2041 = vmatprep.subr.mxu0 0.0
    %2042 = vmatpush1.msra.mxu0 0.0
    %2043 = vmatprep.subr.mxu0 0.0
    %2044 = vmatpush1.msra.mxu0 0.0
    %2045 = vmatprep.subr.mxu0 0.0
    %2046 = vmatpush1.msra.mxu0 0.0
    %2047 = vmatprep.subr.mxu0 0.0
    %2048 = vmatpush1.msra.mxu0 0.0
    %2049 = vmatprep.subr.mxu0 0.0
    %2050 = vmatpush1.msra.mxu0 0.0
    %2051 = vmatprep.subr.mxu0 0.0
    %2052 = vmatpush1.msra.mxu0 0.0
    %2053 = vmatprep.subr.mxu0 0.0
    %2054 = vmatpush1.msra.mxu0 0.0
    %2055 = vmatprep.subr.mxu0 0.0
    %2056 = vmatpush1.msra.mxu0 0.0
    %2057 = vmatprep.subr.mxu0 0.0
    %2058 = vmatpush1.msra.mxu0 0.0
    %2059 = vmatprep.subr.mxu0 0.0
    %2060 = vmatpush1.msra.mxu0 0.0
    %2061 = vmatprep.subr.mxu0 0.0
    %2062 = vmatpush1.msra.mxu0 0.0
    %2063 = vmatprep.subr.mxu0 0.0
    %2064 = vmatpush1.msra.mxu0 0.0
    %2065 = vmatprep.subr.mxu0 0.0
    %2066 = vmatpush1.msra.mxu0 0.0
    %2067 = vmatprep.subr.mxu0 %v2037
    %2068 = vmatpush1.msra.mxu0 %v2034
    %2069 = vmatprep.subr.mxu0 %v1941
    %2070 = vmatpush1.msra.mxu0 %v1940
    %2071 = vmatprep.subr.mxu0 0.0
    %2072 = vmatpush2.msra.mxu0 0.0
    %2073 = vmatprep.subr.mxu0 0.0
    %2074 = vmatpush2.msra.mxu0 0.0
    %2075 = vmatprep.subr.mxu0 0.0
    %2076 = vmatpush2.msra.mxu0 0.0
    %2077 = vmatprep.subr.mxu0 0.0
    %2078 = vmatpush2.msra.mxu0 0.0
    %2079 = vmatprep.subr.mxu0 0.0
    %2080 = vmatpush2.msra.mxu0 0.0
    %2081 = vmatprep.subr.mxu0 0.0
    %2082 = vmatpush2.msra.mxu0 0.0
    %2083 = vmatprep.subr.mxu0 0.0
    %2084 = vmatpush2.msra.mxu0 0.0
    %2085 = vmatprep.subr.mxu0 0.0
    %2086 = vmatpush2.msra.mxu0 0.0
    %2087 = vmatprep.subr.mxu0 0.0
    %2088 = vmatpush2.msra.mxu0 0.0
    %2089 = vmatprep.subr.mxu0 0.0
    %2090 = vmatpush2.msra.mxu0 0.0
    %2091 = vmatprep.subr.mxu0 0.0
    %2092 = vmatpush2.msra.mxu0 0.0
    %2093 = vmatprep.subr.mxu0 0.0
    %2094 = vmatpush2.msra.mxu0 0.0
    %2095 = vmatprep.subr.mxu0 0.0
    %2096 = vmatpush2.msra.mxu0 0.0
    %2097 = vmatprep.subr.mxu0 0.0
    %2098 = vmatpush2.msra.mxu0 0.0
    %2099 = vmatprep.subr.mxu0 0.0
    %2100 = vmatpush2.msra.mxu0 0.0
    %2101 = vmatprep.subr.mxu0 0.0
    %2102 = vmatpush2.msra.mxu0 0.0
    %2103 = vmatprep.mubr.f32.mxu0 0.0
    %2104 = vmatmul.mubr.f32.gmra.mxu0 %v207
    %v2105 = vpop.f32.mrf.mxu0
    %v2106 = vadd.f32 %v2011, %v2105
    %v2107 = vpop.f32.mrf.mxu0
    %v2108 = vadd.f32 %v2013, %v2107
    %2109 = vmatprep.mubr.f32.mxu0 0.0
    %2110 = vmatmul.mubr.f32.gmra.mxu0 %v210
    %v2111 = vpop.f32.mrf.mxu0
    %v2112 = vadd.f32 %v2017, %v2111
    %v2113 = vpop.f32.mrf.mxu0
    %v2114 = vadd.f32 %v2019, %v2113
    %2115 = vmatprep.mubr.f32.mxu0 0.0
    %2116 = vmatmul.mubr.f32.gmra.mxu0 %v213
    %v2117 = vpop.f32.mrf.mxu0
    %v2118 = vadd.f32 %v2023, %v2117
    %v2119 = vpop.f32.mrf.mxu0
    %v2120 = vadd.f32 %v2025, %v2119
    %2121 = vmatprep.mubr.f32.mxu0 0.0
    %2122 = vmatmul.mubr.f32.gmra.mxu0 %v216
    %v2123 = vpop.f32.mrf.mxu0
    %v2124 = vadd.f32 %v2029, %v2123
    %v2125 = vpop.f32.mrf.mxu0
    %v2126 = vadd.f32 %v2031, %v2125
    %2127 = vdwg.mxu0
    %v2128 = vadd.f32 %v2106, %v50
    %v2129 = vadd.f32 %v2108, %v50
    %v2130 = vadd.f32 %v2112, %v55
    %v2131 = vadd.f32 %v2114, %v55
    %v2132 = vadd.f32 %v2118, %v60
    %v2133 = vadd.f32 %v2120, %v60
    %v2134 = vadd.f32 %v2124, %v65
    %v2135 = vadd.f32 %v2126, %v65
    %v2136 = vtanh.pop %v2128
    %v2137 = vtanh.pop %v2129
    %v2138 = vtanh.pop %v2130
    %v2139 = vtanh.pop %v2131
    %v2140 = vtanh.pop %v2132
    %v2141 = vtanh.pop %v2133
    %v2142 = vtanh.pop %v2134
    %v2143 = vtanh.pop %v2135
    %2144 = vmatprep.subr.mxu0 0.0
    %2145 = vmatpush1.msra.mxu0 0.0
    %2146 = vmatprep.subr.mxu0 0.0
    %2147 = vmatpush1.msra.mxu0 0.0
    %2148 = vmatprep.subr.mxu0 0.0
    %2149 = vmatpush1.msra.mxu0 0.0
    %2150 = vmatprep.subr.mxu0 0.0
    %2151 = vmatpush1.msra.mxu0 0.0
    %2152 = vmatprep.subr.mxu0 0.0
    %2153 = vmatpush1.msra.mxu0 0.0
    %2154 = vmatprep.subr.mxu0 0.0
    %2155 = vmatpush1.msra.mxu0 0.0
    %2156 = vmatprep.subr.mxu0 0.0
    %2157 = vmatpush1.msra.mxu0 0.0
    %2158 = vmatprep.subr.mxu0 0.0
    %2159 = vmatpush1.msra.mxu0 0.0
    %2160 = vmatprep.subr.mxu0 0.0
    %2161 = vmatpush1.msra.mxu0 0.0
    %2162 = vmatprep.subr.mxu0 0.0
    %2163 = vmatpush1.msra.mxu0 0.0
    %2164 = vmatprep.subr.mxu0 0.0
    %2165 = vmatpush1.msra.mxu0 0.0
    %2166 = vmatprep.subr.mxu0 0.0
    %2167 = vmatpush1.msra.mxu0 0.0
    %2168 = vmatprep.subr.mxu0 %v2143
    %2169 = vmatpush1.msra.mxu0 %v2142
    %2170 = vmatprep.subr.mxu0 %v2141
    %2171 = vmatpush1.msra.mxu0 %v2140
    %2172 = vmatprep.subr.mxu0 %v2139
    %2173 = vmatpush1.msra.mxu0 %v2138
    %2174 = vmatprep.subr.mxu0 %v2137
    %2175 = vmatpush1.msra.mxu0 %v2136
    %2176 = vmatprep.subr.mxu0 0.0
    %2177 = vmatpush2.msra.mxu0 0.0
    %2178 = vmatprep.subr.mxu0 0.0
    %2179 = vmatpush2.msra.mxu0 0.0
    %2180 = vmatprep.subr.mxu0 0.0
    %2181 = vmatpush2.msra.mxu0 0.0
    %2182 = vmatprep.subr.mxu0 0.0
    %2183 = vmatpush2.msra.mxu0 0.0
    %2184 = vmatprep.subr.mxu0 0.0
    %2185 = vmatpush2.msra.mxu0 0.0
    %2186 = vmatprep.subr.mxu0 0.0
    %2187 = vmatpush2.msra.mxu0 0.0
    %2188 = vmatprep.subr.mxu0 0.0
    %2189 = vmatpush2.msra.mxu0 0.0
    %2190 = vmatprep.subr.mxu0 0.0
    %2191 = vmatpush2.msra.mxu0 0.0
    %2192 = vmatprep.subr.mxu0 0.0
    %2193 = vmatpush2.msra.mxu0 0.0
    %2194 = vmatprep.subr.mxu0 0.0
    %2195 = vmatpush2.msra.mxu0 0.0
    %2196 = vmatprep.subr.mxu0 0.0
    %2197 = vmatpush2.msra.mxu0 0.0
    %2198 = vmatprep.subr.mxu0 0.0
    %2199 = vmatpush2.msra.mxu0 0.0
    %2200 = vmatprep.subr.mxu0 0.0
    %2201 = vmatpush2.msra.mxu0 0.0
    %2202 = vmatprep.subr.mxu0 0.0
    %2203 = vmatpush2.msra.mxu0 0.0
    %2204 = vmatprep.subr.mxu0 0.0
    %2205 = vmatpush2.msra.mxu0 0.0
    %2206 = vmatprep.subr.mxu0 0.0
    %2207 = vmatpush2.msra.mxu0 0.0
    %2208 = vmatprep.mubr.f32.mxu0 0.0
    %2209 = vmatmul.mubr.f32.gmra.mxu0 %v331
    %v2210 = vpop.f32.mrf.mxu0
    %v2211 = vadd.f32 %v73, %v2210
    %v2212 = vpop.f32.mrf.mxu0
    %v2213 = vadd.f32 %v73, %v2212
    %2214 = vmatprep.mubr.f32.mxu0 0.0
    %2215 = vmatmul.mubr.f32.gmra.mxu0 %v334
    %v2216 = vpop.f32.mrf.mxu0
    %v2217 = vadd.f32 %v78, %v2216
    %v2218 = vpop.f32.mrf.mxu0
    %v2219 = vadd.f32 %v78, %v2218
    %2220 = vmatprep.mubr.f32.mxu0 0.0
    %2221 = vmatmul.mubr.f32.gmra.mxu0 %v337
    %v2222 = vpop.f32.mrf.mxu0
    %v2223 = vadd.f32 %v83, %v2222
    %v2224 = vpop.f32.mrf.mxu0
    %v2225 = vadd.f32 %v83, %v2224
    %2226 = vdwg.mxu0
    %v2227 = vmul.f32 %v2223, %v1940
    %v2228 = vmul.f32 %v2225, %v1941
    %v2229 = vsub.f32 %v2217, %v2227
    %v2230 = vsub.f32 %v2219, %v2228
    %v2231 = vadd.f32 %v2211, %v89
    %v2232 = vadd.f32 %v2213, %v89
    %v2233 = vrcp.pop %v2231
    %v2234 = vrcp.pop %v2232
    %v2235 = vmul.f32 %v2229, %v2233
    %v2236 = vmul.f32 %v2230, %v2234
    %s2237 = scalar_lea.vmem %s8, 96
    %2238 = vst [vmem:[%s2237] sm:$0x3f] %v2235
    %2239 = vst [vmem:[%s2237 + $0x8] sm:$0x3f] %v2236
    %s2240 = scalar_lea.vmem %s0, 224
    %v2241 = vld [vmem:[%s2240] sm:$0xff]
    %v2242 = vld [vmem:[%s2240 + $0x8] sm:$0xff]
    %v2243 = vld [vmem:[%s2240 + $0x10] sm:$0x3]
    %v2244 = vld [vmem:[%s2240 + $0x18] sm:$0x3]
    %2245 = vmatprep.subr.mxu0 0.0
    %2246 = vmatpush1.msra.mxu0 0.0
    %2247 = vmatprep.subr.mxu0 0.0
    %2248 = vmatpush1.msra.mxu0 0.0
    %2249 = vmatprep.subr.mxu0 0.0
    %2250 = vmatpush1.msra.mxu0 0.0
    %2251 = vmatprep.subr.mxu0 0.0
    %2252 = vmatpush1.msra.mxu0 0.0
    %2253 = vmatprep.subr.mxu0 0.0
    %2254 = vmatpush1.msra.mxu0 0.0
    %2255 = vmatprep.subr.mxu0 0.0
    %2256 = vmatpush1.msra.mxu0 0.0
    %2257 = vmatprep.subr.mxu0 0.0
    %2258 = vmatpush1.msra.mxu0 0.0
    %2259 = vmatprep.subr.mxu0 0.0
    %2260 = vmatpush1.msra.mxu0 0.0
    %2261 = vmatprep.subr.mxu0 0.0
    %2262 = vmatpush1.msra.mxu0 0.0
    %2263 = vmatprep.subr.mxu0 0.0
    %2264 = vmatpush1.msra.mxu0 0.0
    %2265 = vmatprep.subr.mxu0 0.0
    %2266 = vmatpush1.msra.mxu0 0.0
    %2267 = vmatprep.subr.mxu0 0.0
    %2268 = vmatpush1.msra.mxu0 0.0
    %2269 = vmatprep.subr.mxu0 %v2143
    %2270 = vmatpush1.msra.mxu0 %v2142
    %2271 = vmatprep.subr.mxu0 %v2141
    %2272 = vmatpush1.msra.mxu0 %v2140
    %2273 = vmatprep.subr.mxu0 %v2139
    %2274 = vmatpush1.msra.mxu0 %v2138
    %2275 = vmatprep.subr.mxu0 %v2137
    %2276 = vmatpush1.msra.mxu0 %v2136
    %2277 = vmatprep.subr.mxu0 0.0
    %2278 = vmatpush2.msra.mxu0 0.0
    %2279 = vmatprep.subr.mxu0 0.0
    %2280 = vmatpush2.msra.mxu0 0.0
    %2281 = vmatprep.subr.mxu0 0.0
    %2282 = vmatpush2.msra.mxu0 0.0
    %2283 = vmatprep.subr.mxu0 0.0
    %2284 = vmatpush2.msra.mxu0 0.0
    %2285 = vmatprep.subr.mxu0 0.0
    %2286 = vmatpush2.msra.mxu0 0.0
    %2287 = vmatprep.subr.mxu0 0.0
    %2288 = vmatpush2.msra.mxu0 0.0
    %2289 = vmatprep.subr.mxu0 0.0
    %2290 = vmatpush2.msra.mxu0 0.0
    %2291 = vmatprep.subr.mxu0 0.0
    %2292 = vmatpush2.msra.mxu0 0.0
    %2293 = vmatprep.subr.mxu0 0.0
    %2294 = vmatpush2.msra.mxu0 0.0
    %2295 = vmatprep.subr.mxu0 0.0
    %2296 = vmatpush2.msra.mxu0 0.0
    %2297 = vmatprep.subr.mxu0 0.0
    %2298 = vmatpush2.msra.mxu0 0.0
    %2299 = vmatprep.subr.mxu0 0.0
    %2300 = vmatpush2.msra.mxu0 0.0
    %2301 = vmatprep.subr.mxu0 0.0
    %2302 = vmatpush2.msra.mxu0 0.0
    %2303 = vmatprep.subr.mxu0 0.0
    %2304 = vmatpush2.msra.mxu0 0.0
    %2305 = vmatprep.subr.mxu0 0.0
    %2306 = vmatpush2.msra.mxu0 0.0
    %2307 = vmatprep.subr.mxu0 0.0
    %2308 = vmatpush2.msra.mxu0 0.0
    %2309 = vmatprep.mubr.f32.mxu0 0.0
    %2310 = vmatmul.mubr.f32.gmra.mxu0 %v105
    %v2311 = vpop.f32.mrf.mxu0
    %v2312 = vadd.f32 0.0, %v2311
    %v2313 = vpop.f32.mrf.mxu0
    %v2314 = vadd.f32 0.0, %v2313
    %2315 = vmatprep.mubr.f32.mxu0 0.0
    %2316 = vmatmul.mubr.f32.gmra.mxu0 %v108
    %v2317 = vpop.f32.mrf.mxu0
    %v2318 = vadd.f32 0.0, %v2317
    %v2319 = vpop.f32.mrf.mxu0
    %v2320 = vadd.f32 0.0, %v2319
    %2321 = vmatprep.mubr.f32.mxu0 0.0
    %2322 = vmatmul.mubr.f32.gmra.mxu0 %v111
    %v2323 = vpop.f32.mrf.mxu0
    %v2324 = vadd.f32 0.0, %v2323
    %v2325 = vpop.f32.mrf.mxu0
    %v2326 = vadd.f32 0.0, %v2325
    %2327 = vmatprep.mubr.f32.mxu0 0.0
    %2328 = vmatmul.mubr.f32.gmra.mxu0 %v114
    %v2329 = vpop.f32.mrf.mxu0
    %v2330 = vadd.f32 0.0, %v2329
    %v2331 = vpop.f32.mrf.mxu0
    %v2332 = vadd.f32 0.0, %v2331
    %2333 = vdwg.mxu0
    %v2335 = vsel %vm218, %v2243, 0
    %v2338 = vsel %vm218, %v2244, 0
    %2340 = vmatprep.subr.mxu0 0.0
    %2341 = vmatpush1.msra.mxu0 0.0
    %2342 = vmatprep.subr.mxu0 0.0
    %2343 = vmatpush1.msra.mxu0 0.0
    %2344 = vmatprep.subr.mxu0 0.0
    %2345 = vmatpush1.msra.mxu0 0.0
    %2346 = vmatprep.subr.mxu0 0.0
    %2347 = vmatpush1.msra.mxu0 0.0
    %2348 = vmatprep.subr.mxu0 0.0
    %2349 = vmatpush1.msra.mxu0 0.0
    %2350 = vmatprep.subr.mxu0 0.0
    %2351 = vmatpush1.msra.mxu0 0.0
    %2352 = vmatprep.subr.mxu0 0.0
    %2353 = vmatpush1.msra.mxu0 0.0
    %2354 = vmatprep.subr.mxu0 0.0
    %2355 = vmatpush1.msra.mxu0 0.0
    %2356 = vmatprep.subr.mxu0 0.0
    %2357 = vmatpush1.msra.mxu0 0.0
    %2358 = vmatprep.subr.mxu0 0.0
    %2359 = vmatpush1.msra.mxu0 0.0
    %2360 = vmatprep.subr.mxu0 0.0
    %2361 = vmatpush1.msra.mxu0 0.0
    %2362 = vmatprep.subr.mxu0 0.0
    %2363 = vmatpush1.msra.mxu0 0.0
    %2364 = vmatprep.subr.mxu0 0.0
    %2365 = vmatpush1.msra.mxu0 0.0
    %2366 = vmatprep.subr.mxu0 0.0
    %2367 = vmatpush1.msra.mxu0 0.0
    %2368 = vmatprep.subr.mxu0 %v2338
    %2369 = vmatpush1.msra.mxu0 %v2335
    %2370 = vmatprep.subr.mxu0 %v2242
    %2371 = vmatpush1.msra.mxu0 %v2241
    %2372 = vmatprep.subr.mxu0 0.0
    %2373 = vmatpush2.msra.mxu0 0.0
    %2374 = vmatprep.subr.mxu0 0.0
    %2375 = vmatpush2.msra.mxu0 0.0
    %2376 = vmatprep.subr.mxu0 0.0
    %2377 = vmatpush2.msra.mxu0 0.0
    %2378 = vmatprep.subr.mxu0 0.0
    %2379 = vmatpush2.msra.mxu0 0.0
    %2380 = vmatprep.subr.mxu0 0.0
    %2381 = vmatpush2.msra.mxu0 0.0
    %2382 = vmatprep.subr.mxu0 0.0
    %2383 = vmatpush2.msra.mxu0 0.0
    %2384 = vmatprep.subr.mxu0 0.0
    %2385 = vmatpush2.msra.mxu0 0.0
    %2386 = vmatprep.subr.mxu0 0.0
    %2387 = vmatpush2.msra.mxu0 0.0
    %2388 = vmatprep.subr.mxu0 0.0
    %2389 = vmatpush2.msra.mxu0 0.0
    %2390 = vmatprep.subr.mxu0 0.0
    %2391 = vmatpush2.msra.mxu0 0.0
    %2392 = vmatprep.subr.mxu0 0.0
    %2393 = vmatpush2.msra.mxu0 0.0
    %2394 = vmatprep.subr.mxu0 0.0
    %2395 = vmatpush2.msra.mxu0 0.0
    %2396 = vmatprep.subr.mxu0 0.0
    %2397 = vmatpush2.msra.mxu0 0.0
    %2398 = vmatprep.subr.mxu0 0.0
    %2399 = vmatpush2.msra.mxu0 0.0
    %2400 = vmatprep.subr.mxu0 0.0
    %2401 = vmatpush2.msra.mxu0 0.0
    %2402 = vmatprep.subr.mxu0 0.0
    %2403 = vmatpush2.msra.mxu0 0.0
    %2404 = vmatprep.mubr.f32.mxu0 0.0
    %2405 = vmatmul.mubr.f32.gmra.mxu0 %v207
    %v2406 = vpop.f32.mrf.mxu0
    %v2407 = vadd.f32 %v2312, %v2406
    %v2408 = vpop.f32.mrf.mxu0
    %v2409 = vadd.f32 %v2314, %v2408
    %2410 = vmatprep.mubr.f32.mxu0 0.0
    %2411 = vmatmul.mubr.f32.gmra.mxu0 %v210
    %v2412 = vpop.f32.mrf.mxu0
    %v2413 = vadd.f32 %v2318, %v2412
    %v2414 = vpop.f32.mrf.mxu0
    %v2415 = vadd.f32 %v2320, %v2414
    %2416 = vmatprep.mubr.f32.mxu0 0.0
    %2417 = vmatmul.mubr.f32.gmra.mxu0 %v213
    %v2418 = vpop.f32.mrf.mxu0
    %v2419 = vadd.f32 %v2324, %v2418
    %v2420 = vpop.f32.mrf.mxu0
    %v2421 = vadd.f32 %v2326, %v2420
    %2422 = vmatprep.mubr.f32.mxu0 0.0
    %2423 = vmatmul.mubr.f32.gmra.mxu0 %v216
    %v2424 = vpop.f32.mrf.mxu0
    %v2425 = vadd.f32 %v2330, %v2424
    %v2426 = vpop.f32.mrf.mxu0
    %v2427 = vadd.f32 %v2332, %v2426
    %2428 = vdwg.mxu0
    %v2429 = vadd.f32 %v2407, %v50
    %v2430 = vadd.f32 %v2409, %v50
    %v2431 = vadd.f32 %v2413, %v55
    %v2432 = vadd.f32 %v2415, %v55
    %v2433 = vadd.f32 %v2419, %v60
    %v2434 = vadd.f32 %v2421, %v60
    %v2435 = vadd.f32 %v2425, %v65
    %v2436 = vadd.f32 %v2427, %v65
    %v2437 = vtanh.pop %v2429
    %v2438 = vtanh.pop %v2430
    %v2439 = vtanh.pop %v2431
    %v2440 = vtanh.pop %v2432
    %v2441 = vtanh.pop %v2433
    %v2442 = vtanh.pop %v2434
    %v2443 = vtanh.pop %v2435
    %v2444 = vtanh.pop %v2436
    %2445 = vmatprep.subr.mxu0 0.0
    %2446 = vmatpush1.msra.mxu0 0.0
    %2447 = vmatprep.subr.mxu0 0.0
    %2448 = vmatpush1.msra.mxu0 0.0
    %2449 = vmatprep.subr.mxu0 0.0
    %2450 = vmatpush1.msra.mxu0 0.0
    %2451 = vmatprep.subr.mxu0 0.0
    %2452 = vmatpush1.msra.mxu0 0.0
    %2453 = vmatprep.subr.mxu0 0.0
    %2454 = vmatpush1.msra.mxu0 0.0
    %2455 = vmatprep.subr.mxu0 0.0
    %2456 = vmatpush1.msra.mxu0 0.0
    %2457 = vmatprep.subr.mxu0 0.0
    %2458 = vmatpush1.msra.mxu0 0.0
    %2459 = vmatprep.subr.mxu0 0.0
    %2460 = vmatpush1.msra.mxu0 0.0
    %2461 = vmatprep.subr.mxu0 0.0
    %2462 = vmatpush1.msra.mxu0 0.0
    %2463 = vmatprep.subr.mxu0 0.0
    %2464 = vmatpush1.msra.mxu0 0.0
    %2465 = vmatprep.subr.mxu0 0.0
    %2466 = vmatpush1.msra.mxu0 0.0
    %2467 = vmatprep.subr.mxu0 0.0
    %2468 = vmatpush1.msra.mxu0 0.0
    %2469 = vmatprep.subr.mxu0 %v2444
    %2470 = vmatpush1.msra.mxu0 %v2443
    %2471 = vmatprep.subr.mxu0 %v2442
    %2472 = vmatpush1.msra.mxu0 %v2441
    %2473 = vmatprep.subr.mxu0 %v2440
    %2474 = vmatpush1.msra.mxu0 %v2439
    %2475 = vmatprep.subr.mxu0 %v2438
    %2476 = vmatpush1.msra.mxu0 %v2437
    %2477 = vmatprep.subr.mxu0 0.0
    %2478 = vmatpush2.msra.mxu0 0.0
    %2479 = vmatprep.subr.mxu0 0.0
    %2480 = vmatpush2.msra.mxu0 0.0
    %2481 = vmatprep.subr.mxu0 0.0
    %2482 = vmatpush2.msra.mxu0 0.0
    %2483 = vmatprep.subr.mxu0 0.0
    %2484 = vmatpush2.msra.mxu0 0.0
    %2485 = vmatprep.subr.mxu0 0.0
    %2486 = vmatpush2.msra.mxu0 0.0
    %2487 = vmatprep.subr.mxu0 0.0
    %2488 = vmatpush2.msra.mxu0 0.0
    %2489 = vmatprep.subr.mxu0 0.0
    %2490 = vmatpush2.msra.mxu0 0.0
    %2491 = vmatprep.subr.mxu0 0.0
    %2492 = vmatpush2.msra.mxu0 0.0
    %2493 = vmatprep.subr.mxu0 0.0
    %2494 = vmatpush2.msra.mxu0 0.0
    %2495 = vmatprep.subr.mxu0 0.0
    %2496 = vmatpush2.msra.mxu0 0.0
    %2497 = vmatprep.subr.mxu0 0.0
    %2498 = vmatpush2.msra.mxu0 0.0
    %2499 = vmatprep.subr.mxu0 0.0
    %2500 = vmatpush2.msra.mxu0 0.0
    %2501 = vmatprep.subr.mxu0 0.0
    %2502 = vmatpush2.msra.mxu0 0.0
    %2503 = vmatprep.subr.mxu0 0.0
    %2504 = vmatpush2.msra.mxu0 0.0
    %2505 = vmatprep.subr.mxu0 0.0
    %2506 = vmatpush2.msra.mxu0 0.0
    %2507 = vmatprep.subr.mxu0 0.0
    %2508 = vmatpush2.msra.mxu0 0.0
    %2509 = vmatprep.mubr.f32.mxu0 0.0
    %2510 = vmatmul.mubr.f32.gmra.mxu0 %v331
    %v2511 = vpop.f32.mrf.mxu0
    %v2512 = vadd.f32 %v73, %v2511
    %v2513 = vpop.f32.mrf.mxu0
    %v2514 = vadd.f32 %v73, %v2513
    %2515 = vmatprep.mubr.f32.mxu0 0.0
    %2516 = vmatmul.mubr.f32.gmra.mxu0 %v334
    %v2517 = vpop.f32.mrf.mxu0
    %v2518 = vadd.f32 %v78, %v2517
    %v2519 = vpop.f32.mrf.mxu0
    %v2520 = vadd.f32 %v78, %v2519
    %2521 = vmatprep.mubr.f32.mxu0 0.0
    %2522 = vmatmul.mubr.f32.gmra.mxu0 %v337
    %v2523 = vpop.f32.mrf.mxu0
    %v2524 = vadd.f32 %v83, %v2523
    %v2525 = vpop.f32.mrf.mxu0
    %v2526 = vadd.f32 %v83, %v2525
    %2527 = vdwg.mxu0
    %v2528 = vmul.f32 %v2524, %v2241
    %v2529 = vmul.f32 %v2526, %v2242
    %v2530 = vsub.f32 %v2518, %v2528
    %v2531 = vsub.f32 %v2520, %v2529
    %v2532 = vadd.f32 %v2512, %v89
    %v2533 = vadd.f32 %v2514, %v89
    %v2534 = vrcp.pop %v2532
    %v2535 = vrcp.pop %v2533
    %v2536 = vmul.f32 %v2530, %v2534
    %v2537 = vmul.f32 %v2531, %v2535
    %s2538 = scalar_lea.vmem %s8, 112
    %2539 = vst [vmem:[%s2538] sm:$0x3f] %v2536
    %2540 = vst [vmem:[%s2538 + $0x8] sm:$0x3f] %v2537
    %2541 = vst [vmem:[#allocation2] sm:$0xff] %v2437
    %2542 = vst [vmem:[#allocation2 + $0x8] sm:$0xff] %v2438
    %2543 = vst [vmem:[#allocation2 + $0x10] sm:$0xff] %v2439
    %2544 = vst [vmem:[#allocation2 + $0x18] sm:$0xff] %v2440
    %2545 = vst [vmem:[#allocation2 + $0x20] sm:$0xff] %v2441
    %2546 = vst [vmem:[#allocation2 + $0x28] sm:$0xff] %v2442
    %2547 = vst [vmem:[#allocation2 + $0x30] sm:$0xff] %v2443
    %2548 = vst [vmem:[#allocation2 + $0x38] sm:$0xff] %v2444
    // Predicated region
    $region34: #{tpu_custom_call.1} parent=1 // pred_check
      _
    $region35: #{tpu_custom_call.1} parent=1 // pred_check_branch
      %2550 = sbr.rel (0) target = $region37
    $region36: #{tpu_custom_call.1} parent=1 // pred_region
      _
    $region37: #{tpu_custom_call.1} parent=1 // pred_fallthru
      _
    // Predicated region
    $region38: #{tpu_custom_call.1} parent=1 // pred_check
      _
    $region39: #{tpu_custom_call.1} parent=1 // pred_check_branch
      %2552 = sbr.rel (0) target = $region41
    $region40: #{tpu_custom_call.1} parent=1 // pred_region
      %s2554 = ssub.s32 1024, 1024
      %2555 = vsyncadd [#allocation3], %s2554
      %s2556 = sshll.u32 [#allocation2], 4
      %s2557 = int_to_ptr.vmem [resolvable:$true] %s2556
      %2562 = dma.vmem_to_hbm [thread:$0]  %s2557, 1024, %s9, [#allocation3], 256, 256, 16
    $region41: #{tpu_custom_call.1} parent=1 // pred_fallthru
      _
    // Predicated region
    $region42: #{tpu_custom_call.1} parent=1 // pred_check
      _
    $region43: #{tpu_custom_call.1} parent=1 // pred_check_branch
      %2564 = sbr.rel (0) target = $region45
    $region44: #{tpu_custom_call.1} parent=1 // pred_region
      _
    $region45: #{tpu_custom_call.1} parent=1 // pred_fallthru
      _
    // Predicated region
    $region46: #{tpu_custom_call.1} parent=1 // pred_check
      _
    $region47: #{tpu_custom_call.1} parent=1 // pred_check_branch
      %2566 = sbr.rel (0) target = $region49
    $region48: #{tpu_custom_call.1} parent=1 // pred_region
      %2567 = dma.done [#allocation3], 1024
    $region49: #{tpu_custom_call.1} parent=1 // pred_fallthru
      _
    %2568 = vsyncpa [#allocation3], 1

</llo_original>
